<compile_context>
chip_gen: v7x
topology: tpu7x:2x2x1
jax: 0.10.0
libtpu: 0.0.40
codegen_flags: <defaults>
</compile_context>

<pallas_src>
import math

import jax
import jax.numpy as jnp
from jax.experimental import pallas as pl
from jax.experimental.pallas import tpu as pltpu


def _round_up(x, m):
    return ((x + m - 1) // m) * m


# ----------------------------------------------------------------------------
# Kernel 1: CNN stem.  `fb` frames per grid step.
#   patches (fb*HW, Kpad) @ conv_w (Kpad, 128) -> +bias -> ReLU -> per-frame
#   global average pool -> (fb, 128).  Padded output lanes stay exactly zero
#   (zero weight columns, zero bias) and are sliced off in the wrapper.
# ----------------------------------------------------------------------------
def cnn_kernel(p_ref, w_ref, b_ref, f_ref):
    fb = f_ref.shape[0]
    hw = p_ref.shape[0] // fb
    # One big lane-dense MXU GEMM for all fb frames of this grid step.
    acc = jnp.dot(p_ref[...], w_ref[...], preferred_element_type=jnp.float32)
    acc = jnp.maximum(acc + b_ref[...], 0.0)
    # Per-frame global average pool: aligned sublane slices + XLU reduction.
    means = [jnp.mean(acc[f * hw:(f + 1) * hw, :], axis=0, keepdims=True)
             for f in range(fb)]
    f_ref[...] = jnp.concatenate(means, axis=0)


def cnn_forward(patches, conv_w, conv_b, hw, frames_per_block):
    rows, kpad = patches.shape
    bt = rows // hw
    cout = conv_w.shape[1]
    fb = frames_per_block
    return pl.pallas_call(
        cnn_kernel,
        out_shape=jax.ShapeDtypeStruct((bt, cout), jnp.float32),
        grid=(bt // fb,),
        in_specs=[
            pl.BlockSpec((fb * hw, kpad), lambda i: (i, 0)),
            pl.BlockSpec((kpad, cout), lambda i: (0, 0)),
            pl.BlockSpec((1, cout), lambda i: (0, 0)),
        ],
        out_specs=pl.BlockSpec((fb, cout), lambda i: (i, 0)),
        compiler_params=pltpu.CompilerParams(
            dimension_semantics=("parallel",)),
    )(patches, conv_w, conv_b)


# ----------------------------------------------------------------------------
# Kernel 2: bidirectional GRU, PyTorch gate equations, final hidden state per
# direction.  Layout: features on sublanes, batch on lanes, so the fused-gate
# projections split on sublane-aligned offsets (0, Hh, 2Hh).
#   x:    (T, D, B)          (frame features, transposed in the wrapper)
#   w_ih: (2, 3Hh, D)        (PyTorch weight_ih layout, gate order r, z, n)
#   w_hh: (2, 3Hh, Hh)
#   b_ih / b_hh: (2, 3Hh, 1)
#   out:  (2Hh, B)           rows 0:Hh = forward final, Hh:2Hh = backward final
# ----------------------------------------------------------------------------
def gru_kernel(x_ref, wih_ref, whh_ref, bih_ref, bhh_ref, out_ref):
    f32 = jnp.float32
    T = x_ref.shape[0]
    B = x_ref.shape[2]
    Hh = whh_ref.shape[2]

    # Hoist weight / bias loads out of the unrolled time loop (loaded once).
    wih_f, wih_b = wih_ref[0], wih_ref[1]
    whh_f, whh_b = whh_ref[0], whh_ref[1]
    bih_f, bih_b = bih_ref[0], bih_ref[1]
    bhh_f, bhh_b = bhh_ref[0], bhh_ref[1]

    def step(xp, h, whh, bhh):
        # One fused recurrent GEMM for all three gates: (3Hh, Hh) @ (Hh, B).
        hp = jnp.dot(whh, h, preferred_element_type=f32) + bhh
        r = jax.nn.sigmoid(xp[0:Hh, :] + hp[0:Hh, :])
        z = jax.nn.sigmoid(xp[Hh:2 * Hh, :] + hp[Hh:2 * Hh, :])
        n = jnp.tanh(xp[2 * Hh:3 * Hh, :] + r * hp[2 * Hh:3 * Hh, :])
        return (1.0 - z) * n + z * h

    h_f = jnp.zeros((Hh, B), f32)
    h_b = jnp.zeros((Hh, B), f32)
    # T = 8: static unroll.  The gate-fused input projections depend only on x,
    # so the scheduler overlaps them with the serial recurrence.
    # TODO(synk): switch to lax.fori_loop(..., unroll=True) if T grows past ~8.
    for t in range(T):
        x_f = x_ref[t]               # (D, B)
        x_b = x_ref[T - 1 - t]
        xp_f = jnp.dot(wih_f, x_f, preferred_element_type=f32) + bih_f
        xp_b = jnp.dot(wih_b, x_b, preferred_element_type=f32) + bih_b
        h_f = step(xp_f, h_f, whh_f, bhh_f)
        h_b = step(xp_b, h_b, whh_b, bhh_b)

    out_ref[0:Hh, :] = h_f
    out_ref[Hh:2 * Hh, :] = h_b


def bigru_final(feats, p):
    B, T, D = feats.shape
    Hh = p["w_hh"].shape[2]
    x_tdb = jnp.transpose(feats, (1, 2, 0))          # (T, D, B)

    def fs(shape):
        nd = len(shape)
        return pl.BlockSpec(shape, lambda *_: (0,) * nd)

    args = [x_tdb, p["w_ih"], p["w_hh"], p["b_ih"], p["b_hh"]]
    out_t = pl.pallas_call(
        gru_kernel,
        out_shape=jax.ShapeDtypeStruct((2 * Hh, B), jnp.float32),
        grid=(1,),
        in_specs=[fs(a.shape) for a in args],
        out_specs=pl.BlockSpec((2 * Hh, B), lambda i: (0, 0)),
    )(*args)
    return out_t.T                                    # (B, 2Hh) = (B, embed)


# ----------------------------------------------------------------------------
# Kernel 3: PIENet (1 head) + LayerNorm + l2norm, WHOLE batch per invocation.
#   attention over the T frame features, sigmoid(fc) residual, add, LayerNorm,
#   L2 normalize.  Logits via VPU multiply + lane reduction (no N=1 matmul).
# ----------------------------------------------------------------------------
def pie_kernel(outg_ref, feat_ref, w1_ref, w2_ref, fcw_ref, fcb_ref,
               lng_ref, lnb_ref, o_ref, attn_ref, res_ref):
    f32 = jnp.float32
    B = feat_ref.shape[0]
    w1 = w1_ref[...]                                   # (D, Dh)
    w2row = w2_ref[...]                                # (1, Dh)

    pooled_rows = []
    for b in range(B):                                 # B is tiny & static
        x_b = feat_ref[b]                              # (T, D)
        h = jnp.tanh(jnp.dot(x_b, w1, preferred_element_type=f32))   # (T, Dh)
        # logits = h @ w2^T done as VPU multiply + lane reduce (XLU slot).
        logits = jnp.sum(h * w2row, axis=-1, keepdims=True)          # (T, 1)
        m = jnp.max(logits, axis=0, keepdims=True)
        e = jnp.exp(logits - m)
        denom = jnp.sum(e, axis=0, keepdims=True)
        attn = e * pl.reciprocal(denom, approx=True)                  # softmax
        attn_ref[b] = attn
        pooled_rows.append(jnp.sum(attn * x_b, axis=0, keepdims=True))  # (1, D)

    pooled = jnp.concatenate(pooled_rows, axis=0)                     # (B, D)
    residual = jax.nn.sigmoid(
        jnp.dot(pooled, fcw_ref[...], preferred_element_type=f32)
        + fcb_ref[...])                                               # (B, E)
    y = outg_ref[...] + residual
    mu = jnp.mean(y, axis=-1, keepdims=True)
    var = jnp.mean((y - mu) ** 2, axis=-1, keepdims=True)
    yn = (y - mu) * jax.lax.rsqrt(var + 1e-5) * lng_ref[...] + lnb_ref[...]
    inv_norm = jax.lax.rsqrt(jnp.sum(yn * yn, axis=-1, keepdims=True) + 1e-12)
    o_ref[...] = yn * inv_norm                                        # l2norm
    res_ref[...] = residual


def pie_forward(out_gru, feats, p):
    B, T, D = feats.shape
    E = p["fc_w"].shape[1]

    def fs(shape):
        nd = len(shape)
        return pl.BlockSpec(shape, lambda *_: (0,) * nd)

    args = [out_gru, feats, p["w1"], p["w2"], p["fc_w"], p["fc_b"],
            p["ln_g"], p["ln_b"]]
    return pl.pallas_call(
        pie_kernel,
        out_shape=(jax.ShapeDtypeStruct((B, E), jnp.float32),
                   jax.ShapeDtypeStruct((B, T, 1), jnp.float32),
                   jax.ShapeDtypeStruct((B, E), jnp.float32)),
        grid=(1,),
        in_specs=[fs(a.shape) for a in args],
        out_specs=(pl.BlockSpec((B, E), lambda i: (0, 0)),
                   pl.BlockSpec((B, T, 1), lambda i: (0, 0, 0)),
                   pl.BlockSpec((B, E), lambda i: (0, 0))),
    )(*args)


# ----------------------------------------------------------------------------
# Full forward pass (glue in plain JAX, compute in the kernels above).
# ----------------------------------------------------------------------------
def encoder_video_forward(images, params):
    B, T, C, H, W = images.shape
    cnn_dim = params["w1"].shape[0]
    kpad = params["conv_w"].shape[0]
    BT, HW, K = B * T, H * W, 9 * C

    # CNN stem: im2col (glue) + Pallas conv/ReLU/avg-pool kernel (bf16 inputs).
    # TODO(synk): at real frame sizes, build the 3x3 patches inside the kernel
    # (or use lax.conv) instead of materializing the 9x-inflated im2col in HBM,
    # and tile HW into row blocks to stay within VMEM.
    x = jnp.transpose(images.reshape(BT, C, H, W), (0, 2, 3, 1))   # NCHW->NHWC
    xpad = jnp.pad(x, ((0, 0), (1, 1), (1, 1), (0, 0)))
    cols = [xpad[:, dy:dy + H, dx:dx + W, :] for dy in range(3) for dx in range(3)]
    patches = jnp.concatenate(cols, axis=-1).reshape(BT * HW, K)
    patches = jnp.pad(patches, ((0, 0), (0, kpad - K))).astype(jnp.bfloat16)

    fb = math.gcd(BT, 8)                       # frames per CNN grid step
    feats_pad = cnn_forward(patches, params["conv_w"], params["conv_b"], HW, fb)
    feats = feats_pad[:, :cnn_dim].reshape(B, T, cnn_dim)

    # Bidirectional GRU -> (B, embed_size).  (Dropout = identity in eval mode.)
    out_gru = bigru_final(feats, params)

    # PIENet attention + LayerNorm + l2norm (whole batch, one invocation).
    out, attn, residual = pie_forward(out_gru, feats, params)
    return out, attn, residual


# ----------------------------------------------------------------------------
# Deterministic synthetic parameters (shapes follow EncoderVideo.__init__).
# ----------------------------------------------------------------------------
def init_params(key, C, cnn_dim, embed_size):
    Hh = embed_size // 2        # GRU hidden per direction
    Dh = cnn_dim // 2           # PIE attention hidden
    K = 9 * C
    kpad = _round_up(K, 32)                 # small contraction pad
    cpad = _round_up(cnn_dim, 128)          # lane-dense conv output (sliced later)
    ks = jax.random.split(key, 8)

    def w(k, shape, scale=0.1):
        return scale * jax.random.normal(k, shape, jnp.float32)

    p = {}
    conv_w = jnp.zeros((kpad, cpad), jnp.float32)
    conv_w = conv_w.at[:K, :cnn_dim].set(w(ks[0], (K, cnn_dim)))
    p["conv_w"] = conv_w.astype(jnp.bfloat16)      # bf16 halves HBM->VMEM DMA
    p["conv_b"] = jnp.zeros((1, cpad), jnp.float32)
    # Bidirectional GRU, PyTorch layout: (direction, 3*Hh, in), gate order r,z,n.
    p["w_ih"] = w(ks[1], (2, 3 * Hh, cnn_dim))
    p["w_hh"] = w(ks[2], (2, 3 * Hh, Hh))
    p["b_ih"] = w(ks[3], (2, 3 * Hh, 1), 0.05)
    p["b_hh"] = w(ks[4], (2, 3 * Hh, 1), 0.05)
    # PIENet (num_embeds = 1)
    p["w1"] = w(ks[5], (cnn_dim, Dh))       # attention w_1 (stored transposed)
    p["w2"] = w(ks[6], (1, Dh))             # attention w_2 (row vector)
    p["fc_w"] = w(ks[7], (cnn_dim, embed_size))
    p["fc_b"] = jnp.zeros((1, embed_size), jnp.float32)
    p["ln_g"] = jnp.ones((1, embed_size), jnp.float32)
    p["ln_b"] = jnp.zeros((1, embed_size), jnp.float32)
    return p


if __name__ == "__main__":
    B, T, C, H, W = 2, 8, 3, 16, 16      # (batch, frames, channels, height, width)
    cnn_dim, embed_size = 32, 32
    key = jax.random.PRNGKey(0)
    k_img, k_par = jax.random.split(key)
    images = jax.random.normal(k_img, (B, T, C, H, W), jnp.float32)
    params = init_params(k_par, C, cnn_dim, embed_size)

    out, attn, residual = encoder_video_forward(images, params)
    jax.block_until_ready((out, attn, residual))

    assert out.shape == (B, embed_size)
    assert attn.shape == (B, T, 1)
    assert residual.shape == (B, embed_size)
    print("KERNEL_OK")
</pallas_src>

<mosaic_0001>
module attributes {stable_mosaic.version = 11 : i64} {
  func.func @cnn_kernel(%arg0: i32, %arg1: memref<2048x32xbf16, #tpu.memory_space<vmem>>, %arg2: memref<32x128xbf16, #tpu.memory_space<vmem>>, %arg3: memref<1x128xf32, #tpu.memory_space<vmem>>, %arg4: memref<8x128xf32, #tpu.memory_space<vmem>>) attributes {dimension_semantics = [#tpu.dimension_semantics<parallel>], iteration_bounds = array<i64: 2>, scalar_prefetch = 0 : i64, scratch_operands = 0 : i64, tpu.core_type = #tpu.core_type<tc>, window_params = [{transform_indices = @transform_0, window_bounds = array<i64: 2048, 32>}, {pipeline_mode = #tpu.pipeline_mode<synchronous>, transform_indices = @transform_1, window_bounds = array<i64: 32, 128>}, {pipeline_mode = #tpu.pipeline_mode<synchronous>, transform_indices = @transform_2, window_bounds = array<i64: 1, 128>}, {transform_indices = @transform_3, window_bounds = array<i64: 8, 128>}]} {
    %c0 = arith.constant 0 : index
    %c0_0 = arith.constant 0 : index
    %0 = vector.load %arg1[%c0, %c0_0] : memref<2048x32xbf16, #tpu.memory_space<vmem>>, vector<2048x32xbf16>
    %c0_1 = arith.constant 0 : index
    %c0_2 = arith.constant 0 : index
    %1 = vector.load %arg2[%c0_1, %c0_2] : memref<32x128xbf16, #tpu.memory_space<vmem>>, vector<32x128xbf16>
    %cst = arith.constant dense<0.000000e+00> : vector<2048x128xf32>
    %2 = tpu.matmul %0, %1, %cst {dimension_numbers = #tpu.dot_dimension_numbers<[1], [0], [0], [1], [0, 0, 1, 1], [], []>} : vector<2048x32xbf16>, vector<32x128xbf16>, vector<2048x128xf32> -> vector<2048x128xf32>
    %c0_3 = arith.constant 0 : index
    %c0_4 = arith.constant 0 : index
    %3 = vector.load %arg3[%c0_3, %c0_4] : memref<1x128xf32, #tpu.memory_space<vmem>>, vector<1x128xf32>
    %4 = vector.broadcast %3 : vector<1x128xf32> to vector<2048x128xf32>
    %5 = arith.addf %2, %4 : vector<2048x128xf32>
    %cst_5 = arith.constant 0.000000e+00 : f32
    %6 = vector.broadcast %cst_5 : f32 to vector<2048x128xf32>
    %7 = arith.maximumf %5, %6 : vector<2048x128xf32>
    %8 = vector.extract_strided_slice %7 {offsets = [0, 0], sizes = [256, 128], strides = [1, 1]} : vector<2048x128xf32> to vector<256x128xf32>
    %cst_6 = arith.constant dense<0.000000e+00> : vector<128xf32>
    %9 = vector.multi_reduction <add>, %8, %cst_6 [0] : vector<256x128xf32> to vector<128xf32>
    %10 = vector.shape_cast %9 : vector<128xf32> to vector<1x128xf32>
    %cst_7 = arith.constant 2.560000e+02 : f32
    %11 = vector.broadcast %cst_7 : f32 to vector<1x128xf32>
    %12 = arith.divf %10, %11 : vector<1x128xf32>
    %13 = vector.extract_strided_slice %7 {offsets = [256, 0], sizes = [256, 128], strides = [1, 1]} : vector<2048x128xf32> to vector<256x128xf32>
    %cst_8 = arith.constant dense<0.000000e+00> : vector<128xf32>
    %14 = vector.multi_reduction <add>, %13, %cst_8 [0] : vector<256x128xf32> to vector<128xf32>
    %15 = vector.shape_cast %14 : vector<128xf32> to vector<1x128xf32>
    %cst_9 = arith.constant 2.560000e+02 : f32
    %16 = vector.broadcast %cst_9 : f32 to vector<1x128xf32>
    %17 = arith.divf %15, %16 : vector<1x128xf32>
    %18 = vector.extract_strided_slice %7 {offsets = [512, 0], sizes = [256, 128], strides = [1, 1]} : vector<2048x128xf32> to vector<256x128xf32>
    %cst_10 = arith.constant dense<0.000000e+00> : vector<128xf32>
    %19 = vector.multi_reduction <add>, %18, %cst_10 [0] : vector<256x128xf32> to vector<128xf32>
    %20 = vector.shape_cast %19 : vector<128xf32> to vector<1x128xf32>
    %cst_11 = arith.constant 2.560000e+02 : f32
    %21 = vector.broadcast %cst_11 : f32 to vector<1x128xf32>
    %22 = arith.divf %20, %21 : vector<1x128xf32>
    %23 = vector.extract_strided_slice %7 {offsets = [768, 0], sizes = [256, 128], strides = [1, 1]} : vector<2048x128xf32> to vector<256x128xf32>
    %cst_12 = arith.constant dense<0.000000e+00> : vector<128xf32>
    %24 = vector.multi_reduction <add>, %23, %cst_12 [0] : vector<256x128xf32> to vector<128xf32>
    %25 = vector.shape_cast %24 : vector<128xf32> to vector<1x128xf32>
    %cst_13 = arith.constant 2.560000e+02 : f32
    %26 = vector.broadcast %cst_13 : f32 to vector<1x128xf32>
    %27 = arith.divf %25, %26 : vector<1x128xf32>
    %28 = vector.extract_strided_slice %7 {offsets = [1024, 0], sizes = [256, 128], strides = [1, 1]} : vector<2048x128xf32> to vector<256x128xf32>
    %cst_14 = arith.constant dense<0.000000e+00> : vector<128xf32>
    %29 = vector.multi_reduction <add>, %28, %cst_14 [0] : vector<256x128xf32> to vector<128xf32>
    %30 = vector.shape_cast %29 : vector<128xf32> to vector<1x128xf32>
    %cst_15 = arith.constant 2.560000e+02 : f32
    %31 = vector.broadcast %cst_15 : f32 to vector<1x128xf32>
    %32 = arith.divf %30, %31 : vector<1x128xf32>
    %33 = vector.extract_strided_slice %7 {offsets = [1280, 0], sizes = [256, 128], strides = [1, 1]} : vector<2048x128xf32> to vector<256x128xf32>
    %cst_16 = arith.constant dense<0.000000e+00> : vector<128xf32>
    %34 = vector.multi_reduction <add>, %33, %cst_16 [0] : vector<256x128xf32> to vector<128xf32>
    %35 = vector.shape_cast %34 : vector<128xf32> to vector<1x128xf32>
    %cst_17 = arith.constant 2.560000e+02 : f32
    %36 = vector.broadcast %cst_17 : f32 to vector<1x128xf32>
    %37 = arith.divf %35, %36 : vector<1x128xf32>
    %38 = vector.extract_strided_slice %7 {offsets = [1536, 0], sizes = [256, 128], strides = [1, 1]} : vector<2048x128xf32> to vector<256x128xf32>
    %cst_18 = arith.constant dense<0.000000e+00> : vector<128xf32>
    %39 = vector.multi_reduction <add>, %38, %cst_18 [0] : vector<256x128xf32> to vector<128xf32>
    %40 = vector.shape_cast %39 : vector<128xf32> to vector<1x128xf32>
    %cst_19 = arith.constant 2.560000e+02 : f32
    %41 = vector.broadcast %cst_19 : f32 to vector<1x128xf32>
    %42 = arith.divf %40, %41 : vector<1x128xf32>
    %43 = vector.extract_strided_slice %7 {offsets = [1792, 0], sizes = [256, 128], strides = [1, 1]} : vector<2048x128xf32> to vector<256x128xf32>
    %cst_20 = arith.constant dense<0.000000e+00> : vector<128xf32>
    %44 = vector.multi_reduction <add>, %43, %cst_20 [0] : vector<256x128xf32> to vector<128xf32>
    %45 = vector.shape_cast %44 : vector<128xf32> to vector<1x128xf32>
    %cst_21 = arith.constant 2.560000e+02 : f32
    %46 = vector.broadcast %cst_21 : f32 to vector<1x128xf32>
    %47 = arith.divf %45, %46 : vector<1x128xf32>
    %48 = tpu.concatenate %12, %17, %22, %27, %32, %37, %42, %47 in 0 : vector<1x128xf32>, vector<1x128xf32>, vector<1x128xf32>, vector<1x128xf32>, vector<1x128xf32>, vector<1x128xf32>, vector<1x128xf32>, vector<1x128xf32> -> vector<8x128xf32>
    %c0_22 = arith.constant 0 : index
    %c0_23 = arith.constant 0 : index
    %49 = vector.load %arg4[%c0_22, %c0_23] : memref<8x128xf32, #tpu.memory_space<vmem>>, vector<8x128xf32>
    tpu.vector_store %arg4[%c0_22, %c0_23], %48 {strides = array<i32>} : memref<8x128xf32, #tpu.memory_space<vmem>>, vector<8x128xf32>,
    return
  }
  func.func @transform_0(%arg0: i32) -> (i32, i32) {
    %c0_i32 = arith.constant 0 : i32
    %c0_i32_0 = arith.constant 0 : i32
    return %arg0, %c0_i32 : i32, i32
  }
  func.func @transform_1(%arg0: i32) -> (i32, i32) {
    %c0_i32 = arith.constant 0 : i32
    %c0_i32_0 = arith.constant 0 : i32
    %c0_i32_1 = arith.constant 0 : i32
    return %c0_i32, %c0_i32_0 : i32, i32
  }
  func.func @transform_2(%arg0: i32) -> (i32, i32) {
    %c0_i32 = arith.constant 0 : i32
    %c0_i32_0 = arith.constant 0 : i32
    %c0_i32_1 = arith.constant 0 : i32
    return %c0_i32, %c0_i32_0 : i32, i32
  }
  func.func @transform_3(%arg0: i32) -> (i32, i32) {
    %c0_i32 = arith.constant 0 : i32
    %c0_i32_0 = arith.constant 0 : i32
    return %arg0, %c0_i32 : i32, i32
  }
}

</mosaic_0001>

<llo_original>
// kernel: tpu_custom_call.1
$region0: #{tpu_custom_call.1}
  #allocation0 [shape = 'u32[]', space=smem, size = 0x4, offset = 0x4, fixed_abs, tag = 'smem constant byte address 0x4 - core index']
  #allocation1 [shape = 'u32[144,128]{1,0:T(1,128)}', space=vmem, size = 0x12000, scoped, tag = 'internal scratch']
  %s0 = inlined_call_operand.vmem [shape: bf16[4096,32], index: 0, kind: input, shape index: {}]
  %s1 = inlined_call_operand.vmem [shape: bf16[32,128], index: 1, kind: input, shape index: {}]
  %s2 = inlined_call_operand.vmem [shape: f32[1,128], index: 2, kind: input, shape index: {}]
  %s3 = inlined_call_operand.hbm [shape: f32[16,128], index: 3, kind: output, shape index: {}]
  %s4 = sld [smem:[#allocation0]]
  $region45: #{tpu_custom_call.1} parent=0
    _
  %s6 = ssub.s32 1, %s4
  %s7 = scalar_select 0, %s6, %s4
  $region1: #{tpu_custom_call.1} parent=0
    #allocation2 [shape = 'u8[8192]{0}', space=vmem, size = 0x2000, scoped, tag = 'output window, operand 0']
    #allocation3 [shape = 's32[2]{0}', space=sflag, size = 0x8, scoped, tag = 'scoped memory for tpu_custom_call.1']
    %8 = vsyncpa [#allocation3], 0
    %s9 = scalar_lea.sflag [#allocation3], 1
    %10 = vsyncpa %s9, 0
    loop: start=0, step=1, limit=4
    $region2: #{tpu_custom_call.1} parent=1 // loop_pre_header
      _
    $region3: #{tpu_custom_call.1} parent=1 // loop_header
      %s12 = sphi 0, %s16
      %p13 = scmp.ge.s32.totalorder %s12, 4
      %s22 = sphi 0, %s24
      %s25 = sphi 0, %s22
      %s26 = sphi 0, %s25
      %s42 = sphi 0, %s26
      %s46 = sphi 0, %s46
      %s48 = sphi 0, %s46
      %s49 = sphi 0, %s48
      %s63 = sphi 0, %s49
      %s67 = sphi 0, %s67
      %s69 = sphi 0, %s67
      %s70 = sphi 0, %s69
      %s84 = sphi 0, %s70
      %s90 = sphi 0, %s92
      %s93 = sphi 0, %s90
      %s94 = sphi 0, %s93
      %s110 = sphi 0, %s94
    $region4: #{tpu_custom_call.1} parent=1 // loop_header_branch
      %15 = sbr.rel (%p13) target = $region8
    $region5: #{tpu_custom_call.1} parent=1 // loop_body
      %s17 = ssub.s32 %s12, 1
      %s18 = ssub.s32 %s12, 2
      %s19 = sadd.s32 %s12, 1
      %s20 = ssub.s32 %s12, %s19
      %p21 = scmp.eq.s32.totalorder %s20, 0
      %s23 = sadd.s32 %s22, 1
      %s24 = scalar_select %p21, %s22, %s23
      %p27 = pneg %p21
      %p28 = scmp.eq.s32.totalorder %s12, 1
      %p29 = por %p27, %p28
      %p30 = scmp.ne.s32.totalorder %s22, %s25
      %p31 = scmp.eq.s32.totalorder %s12, 0
      %p32 = por %p30, %p31
      %p33 = scmp.ne.s32.totalorder %s22, %s25
      %p34 = scmp.eq.s32.totalorder %s17, 1
      %p35 = por %p33, %p34
      %p36 = scmp.ne.s32.totalorder %s25, %s26
      %p37 = scmp.eq.s32.totalorder %s17, 0
      %p38 = por %p36, %p37
      %p39 = scmp.ne.s32.totalorder %s25, %s26
      %p40 = scmp.eq.s32.totalorder %s18, 1
      %p41 = por %p39, %p40
      %p43 = scmp.ne.s32.totalorder %s26, %s42
      %p44 = scmp.eq.s32.totalorder %s18, 0
      %p45 = por %p43, %p44
      %s47 = sadd.s32 %s46, 1
      %p50 = scmp.eq.s32.totalorder %s12, 1
      %p51 = scmp.ne.s32.totalorder %s46, %s48
      %p52 = scmp.eq.s32.totalorder %s12, 0
      %p53 = por %p51, %p52
      %p54 = scmp.ne.s32.totalorder %s46, %s48
      %p55 = scmp.eq.s32.totalorder %s17, 1
      %p56 = por %p54, %p55
      %p57 = scmp.ne.s32.totalorder %s48, %s49
      %p58 = scmp.eq.s32.totalorder %s17, 0
      %p59 = por %p57, %p58
      %p60 = scmp.ne.s32.totalorder %s48, %s49
      %p61 = scmp.eq.s32.totalorder %s18, 1
      %p62 = por %p60, %p61
      %p64 = scmp.ne.s32.totalorder %s49, %s63
      %p65 = scmp.eq.s32.totalorder %s18, 0
      %p66 = por %p64, %p65
      %s68 = sadd.s32 %s67, 1
      %p71 = scmp.eq.s32.totalorder %s12, 1
      %p72 = scmp.ne.s32.totalorder %s67, %s69
      %p73 = scmp.eq.s32.totalorder %s12, 0
      %p74 = por %p72, %p73
      %p75 = scmp.ne.s32.totalorder %s67, %s69
      %p76 = scmp.eq.s32.totalorder %s17, 1
      %p77 = por %p75, %p76
      %p78 = scmp.ne.s32.totalorder %s69, %s70
      %p79 = scmp.eq.s32.totalorder %s17, 0
      %p80 = por %p78, %p79
      %p81 = scmp.ne.s32.totalorder %s69, %s70
      %p82 = scmp.eq.s32.totalorder %s18, 1
      %p83 = por %p81, %p82
      %p85 = scmp.ne.s32.totalorder %s70, %s84
      %p86 = scmp.eq.s32.totalorder %s18, 0
      %p87 = por %p85, %p86
      %s88 = ssub.s32 %s12, %s19
      %p89 = scmp.eq.s32.totalorder %s88, 0
      %s91 = sadd.s32 %s90, 1
      %s92 = scalar_select %p89, %s90, %s91
      %p95 = pneg %p89
      %p96 = scmp.eq.s32.totalorder %s12, 1
      %p97 = por %p95, %p96
      %p98 = scmp.ne.s32.totalorder %s90, %s93
      %p99 = scmp.eq.s32.totalorder %s12, 0
      %p100 = por %p98, %p99
      %p101 = scmp.ne.s32.totalorder %s90, %s93
      %p102 = scmp.eq.s32.totalorder %s17, 1
      %p103 = por %p101, %p102
      %p104 = scmp.ne.s32.totalorder %s93, %s94
      %p105 = scmp.eq.s32.totalorder %s17, 0
      %p106 = por %p104, %p105
      %p107 = scmp.ne.s32.totalorder %s93, %s94
      %p108 = scmp.eq.s32.totalorder %s18, 1
      %p109 = por %p107, %p108
      %p111 = scmp.ne.s32.totalorder %s94, %s110
      %p112 = scmp.eq.s32.totalorder %s18, 0
      %p113 = por %p111, %p112
      %p114 = scmp.le.s32.totalorder 1, %s12
      %p115 = scmp.lt.s32.totalorder %s12, 3
      %p116 = pnand %p114, %p115
      %p117 = pneg %p116
      // Predicated region
      $region9: #{tpu_custom_call.1} parent=5 // pred_check
        _
      $region10: #{tpu_custom_call.1} parent=5 // pred_check_branch
        %119 = sbr.rel (%p116) target = $region12
      $region11: #{tpu_custom_call.1} parent=5 // pred_region
        %s120 = ssub.s32 %s12, 1
        // Predicated region
        $region13: #{tpu_custom_call.1} parent=11 // pred_check
          %p121 = pneg %p59
        $region14: #{tpu_custom_call.1} parent=11 // pred_check_branch
          %123 = sbr.rel (%p121) target = $region16
        $region15: #{tpu_custom_call.1} parent=11 // pred_region
          _
        $region16: #{tpu_custom_call.1} parent=11 // pred_fallthru
          _
        // Predicated region
        $region17: #{tpu_custom_call.1} parent=11 // pred_check
          %p124 = pneg %p80
        $region18: #{tpu_custom_call.1} parent=11 // pred_check_branch
          %126 = sbr.rel (%p124) target = $region20
        $region19: #{tpu_custom_call.1} parent=11 // pred_region
          _
        $region20: #{tpu_custom_call.1} parent=11 // pred_fallthru
          _
      $region12: #{tpu_custom_call.1} parent=5 // pred_fallthru
        _
      %p127 = scmp.lt.s32.totalorder %s12, 2
      // Predicated region
      $region21: #{tpu_custom_call.1} parent=5 // pred_check
        %p128 = pneg %p127
      $region22: #{tpu_custom_call.1} parent=5 // pred_check_branch
        %130 = sbr.rel (%p128) target = $region24
      $region23: #{tpu_custom_call.1} parent=5 // pred_region
        // Predicated region
        $region25: #{tpu_custom_call.1} parent=23 // pred_check
          %p131 = pneg %p32
        $region26: #{tpu_custom_call.1} parent=23 // pred_check_branch
          %133 = sbr.rel (%p131) target = $region28
        $region27: #{tpu_custom_call.1} parent=23 // pred_region
          %s134 = smul.u32 256, %s12
          %p135 = scmp.lt.s32.totalorder %s134, 511
          %s136 = scalar_select %p135, %s134, 511
          %s137 = smul.addr %s136, 4
          %s138 = scalar_lea.vmem %s0, %s137
          %s139 = smul.u32 256, %s12
        $region28: #{tpu_custom_call.1} parent=23 // pred_fallthru
          _
      $region24: #{tpu_custom_call.1} parent=5 // pred_fallthru
        _
      %p140 = scmp.le.s32.totalorder 1, %s12
      %p141 = scmp.lt.s32.totalorder %s12, 3
      %p142 = pnand %p140, %p141
      %p143 = pneg %p142
      // Predicated region
      $region29: #{tpu_custom_call.1} parent=5 // pred_check
        _
      $region30: #{tpu_custom_call.1} parent=5 // pred_check_branch
        %145 = sbr.rel (%p142) target = $region32
      $region31: #{tpu_custom_call.1} parent=5 // pred_region
        %s146 = ssub.s32 %s12, 1
        %s147 = smul.u32 256, %s17
        %p148 = scmp.lt.s32.totalorder %s147, 511
        %s149 = scalar_select %p148, %s147, 511
        %s150 = smul.addr %s149, 4
        %s151 = scalar_lea.vmem %s0, %s150
        %p152 = pneg %p38
        %p153 = pneg %p35
        %p154 = pneg %p59
        %p155 = pneg %p56
        %p156 = pneg %p80
        %p157 = pneg %p77
        %p158 = pneg %p106
        %p159 = pneg %p103
        %s160 = sand.u32 %s93, 1
        %s161 = scalar_lea.sflag [#allocation3], %s160
        %s162 = sand.u32 %s93, 1
        %s163 = smul.addr %s162, 8
        %s164 = scalar_lea.vmem [#allocation2], %s163
        %s165 = smul.u32 256, %s17
        %p166 = scmp.lt.s32.totalorder %s165, 511
        %s167 = scalar_select %p166, %s165, 511
        %s168 = smul.addr %s167, 4
        %s169 = scalar_lea.vmem %s0, %s168
        %s170 = smul.u32 256, %s17
        %v172 = vld [vmem:[%s169] sm:$0xf]
        %v173 = vld [vmem:[%s169 + $0x4] sm:$0xf]
        %v174 = vld [vmem:[%s169 + $0x8] sm:$0xf]
        %v175 = vld [vmem:[%s169 + $0xc] sm:$0xf]
        %v176 = vld [vmem:[%s169 + $0x10] sm:$0xf]
        %v177 = vld [vmem:[%s169 + $0x14] sm:$0xf]
        %v178 = vld [vmem:[%s169 + $0x18] sm:$0xf]
        %v179 = vld [vmem:[%s169 + $0x1c] sm:$0xf]
        %v180 = vld [vmem:[%s169 + $0x20] sm:$0xf]
        %v181 = vld [vmem:[%s169 + $0x24] sm:$0xf]
        %v182 = vld [vmem:[%s169 + $0x28] sm:$0xf]
        %v183 = vld [vmem:[%s169 + $0x2c] sm:$0xf]
        %v184 = vld [vmem:[%s169 + $0x30] sm:$0xf]
        %v185 = vld [vmem:[%s169 + $0x34] sm:$0xf]
        %v186 = vld [vmem:[%s169 + $0x38] sm:$0xf]
        %v187 = vld [vmem:[%s169 + $0x3c] sm:$0xf]
        %v188 = vld [vmem:[%s169 + $0x40] sm:$0xf]
        %v189 = vld [vmem:[%s169 + $0x44] sm:$0xf]
        %v190 = vld [vmem:[%s169 + $0x48] sm:$0xf]
        %v191 = vld [vmem:[%s169 + $0x4c] sm:$0xf]
        %v192 = vld [vmem:[%s169 + $0x50] sm:$0xf]
        %v193 = vld [vmem:[%s169 + $0x54] sm:$0xf]
        %v194 = vld [vmem:[%s169 + $0x58] sm:$0xf]
        %v195 = vld [vmem:[%s169 + $0x5c] sm:$0xf]
        %v196 = vld [vmem:[%s169 + $0x60] sm:$0xf]
        %v197 = vld [vmem:[%s169 + $0x64] sm:$0xf]
        %v198 = vld [vmem:[%s169 + $0x68] sm:$0xf]
        %v199 = vld [vmem:[%s169 + $0x6c] sm:$0xf]
        %v200 = vld [vmem:[%s169 + $0x70] sm:$0xf]
        %v201 = vld [vmem:[%s169 + $0x74] sm:$0xf]
        %v202 = vld [vmem:[%s169 + $0x78] sm:$0xf]
        %v203 = vld [vmem:[%s169 + $0x7c] sm:$0xf]
        %v204 = vld [vmem:[%s169 + $0x80] sm:$0xf]
        %v205 = vld [vmem:[%s169 + $0x84] sm:$0xf]
        %v206 = vld [vmem:[%s169 + $0x88] sm:$0xf]
        %v207 = vld [vmem:[%s169 + $0x8c] sm:$0xf]
        %v208 = vld [vmem:[%s169 + $0x90] sm:$0xf]
        %v209 = vld [vmem:[%s169 + $0x94] sm:$0xf]
        %v210 = vld [vmem:[%s169 + $0x98] sm:$0xf]
        %v211 = vld [vmem:[%s169 + $0x9c] sm:$0xf]
        %v212 = vld [vmem:[%s169 + $0xa0] sm:$0xf]
        %v213 = vld [vmem:[%s169 + $0xa4] sm:$0xf]
        %v214 = vld [vmem:[%s169 + $0xa8] sm:$0xf]
        %v215 = vld [vmem:[%s169 + $0xac] sm:$0xf]
        %v216 = vld [vmem:[%s169 + $0xb0] sm:$0xf]
        %v217 = vld [vmem:[%s169 + $0xb4] sm:$0xf]
        %v218 = vld [vmem:[%s169 + $0xb8] sm:$0xf]
        %v219 = vld [vmem:[%s169 + $0xbc] sm:$0xf]
        %v220 = vld [vmem:[%s169 + $0xc0] sm:$0xf]
        %v221 = vld [vmem:[%s169 + $0xc4] sm:$0xf]
        %v222 = vld [vmem:[%s169 + $0xc8] sm:$0xf]
        %v223 = vld [vmem:[%s169 + $0xcc] sm:$0xf]
        %v224 = vld [vmem:[%s169 + $0xd0] sm:$0xf]
        %v225 = vld [vmem:[%s169 + $0xd4] sm:$0xf]
        %v226 = vld [vmem:[%s169 + $0xd8] sm:$0xf]
        %v227 = vld [vmem:[%s169 + $0xdc] sm:$0xf]
        %v228 = vld [vmem:[%s169 + $0xe0] sm:$0xf]
        %v229 = vld [vmem:[%s169 + $0xe4] sm:$0xf]
        %v230 = vld [vmem:[%s169 + $0xe8] sm:$0xf]
        %v231 = vld [vmem:[%s169 + $0xec] sm:$0xf]
        %v232 = vld [vmem:[%s169 + $0xf0] sm:$0xf]
        %v233 = vld [vmem:[%s169 + $0xf4] sm:$0xf]
        %v234 = vld [vmem:[%s169 + $0xf8] sm:$0xf]
        %v235 = vld [vmem:[%s169 + $0xfc] sm:$0xf]
        %v236 = vld [vmem:[%s169 + $0x100] sm:$0xf]
        %v237 = vld [vmem:[%s169 + $0x104] sm:$0xf]
        %v238 = vld [vmem:[%s169 + $0x108] sm:$0xf]
        %v239 = vld [vmem:[%s169 + $0x10c] sm:$0xf]
        %v240 = vld [vmem:[%s169 + $0x110] sm:$0xf]
        %v241 = vld [vmem:[%s169 + $0x114] sm:$0xf]
        %v242 = vld [vmem:[%s169 + $0x118] sm:$0xf]
        %v243 = vld [vmem:[%s169 + $0x11c] sm:$0xf]
        %v244 = vld [vmem:[%s169 + $0x120] sm:$0xf]
        %v245 = vld [vmem:[%s169 + $0x124] sm:$0xf]
        %v246 = vld [vmem:[%s169 + $0x128] sm:$0xf]
        %v247 = vld [vmem:[%s169 + $0x12c] sm:$0xf]
        %v248 = vld [vmem:[%s169 + $0x130] sm:$0xf]
        %v249 = vld [vmem:[%s169 + $0x134] sm:$0xf]
        %v250 = vld [vmem:[%s169 + $0x138] sm:$0xf]
        %v251 = vld [vmem:[%s169 + $0x13c] sm:$0xf]
        %v252 = vld [vmem:[%s169 + $0x140] sm:$0xf]
        %v253 = vld [vmem:[%s169 + $0x144] sm:$0xf]
        %v254 = vld [vmem:[%s169 + $0x148] sm:$0xf]
        %v255 = vld [vmem:[%s169 + $0x14c] sm:$0xf]
        %v256 = vld [vmem:[%s169 + $0x150] sm:$0xf]
        %v257 = vld [vmem:[%s169 + $0x154] sm:$0xf]
        %v258 = vld [vmem:[%s169 + $0x158] sm:$0xf]
        %v259 = vld [vmem:[%s169 + $0x15c] sm:$0xf]
        %v260 = vld [vmem:[%s169 + $0x160] sm:$0xf]
        %v261 = vld [vmem:[%s169 + $0x164] sm:$0xf]
        %v262 = vld [vmem:[%s169 + $0x168] sm:$0xf]
        %v263 = vld [vmem:[%s169 + $0x16c] sm:$0xf]
        %v264 = vld [vmem:[%s169 + $0x170] sm:$0xf]
        %v265 = vld [vmem:[%s169 + $0x174] sm:$0xf]
        %v266 = vld [vmem:[%s169 + $0x178] sm:$0xf]
        %v267 = vld [vmem:[%s169 + $0x17c] sm:$0xf]
        %v268 = vld [vmem:[%s169 + $0x180] sm:$0xf]
        %v269 = vld [vmem:[%s169 + $0x184] sm:$0xf]
        %v270 = vld [vmem:[%s169 + $0x188] sm:$0xf]
        %v271 = vld [vmem:[%s169 + $0x18c] sm:$0xf]
        %v272 = vld [vmem:[%s169 + $0x190] sm:$0xf]
        %v273 = vld [vmem:[%s169 + $0x194] sm:$0xf]
        %v274 = vld [vmem:[%s169 + $0x198] sm:$0xf]
        %v275 = vld [vmem:[%s169 + $0x19c] sm:$0xf]
        %v276 = vld [vmem:[%s169 + $0x1a0] sm:$0xf]
        %v277 = vld [vmem:[%s169 + $0x1a4] sm:$0xf]
        %v278 = vld [vmem:[%s169 + $0x1a8] sm:$0xf]
        %v279 = vld [vmem:[%s169 + $0x1ac] sm:$0xf]
        %v280 = vld [vmem:[%s169 + $0x1b0] sm:$0xf]
        %v281 = vld [vmem:[%s169 + $0x1b4] sm:$0xf]
        %v282 = vld [vmem:[%s169 + $0x1b8] sm:$0xf]
        %v283 = vld [vmem:[%s169 + $0x1bc] sm:$0xf]
        %v284 = vld [vmem:[%s169 + $0x1c0] sm:$0xf]
        %v285 = vld [vmem:[%s169 + $0x1c4] sm:$0xf]
        %v286 = vld [vmem:[%s169 + $0x1c8] sm:$0xf]
        %v287 = vld [vmem:[%s169 + $0x1cc] sm:$0xf]
        %v288 = vld [vmem:[%s169 + $0x1d0] sm:$0xf]
        %v289 = vld [vmem:[%s169 + $0x1d4] sm:$0xf]
        %v290 = vld [vmem:[%s169 + $0x1d8] sm:$0xf]
        %v291 = vld [vmem:[%s169 + $0x1dc] sm:$0xf]
        %v292 = vld [vmem:[%s169 + $0x1e0] sm:$0xf]
        %v293 = vld [vmem:[%s169 + $0x1e4] sm:$0xf]
        %v294 = vld [vmem:[%s169 + $0x1e8] sm:$0xf]
        %v295 = vld [vmem:[%s169 + $0x1ec] sm:$0xf]
        %v296 = vld [vmem:[%s169 + $0x1f0] sm:$0xf]
        %v297 = vld [vmem:[%s169 + $0x1f4] sm:$0xf]
        %v298 = vld [vmem:[%s169 + $0x1f8] sm:$0xf]
        %v299 = vld [vmem:[%s169 + $0x1fc] sm:$0xf]
        %v300 = vld [vmem:[%s169 + $0x200] sm:$0xf]
        %v301 = vld [vmem:[%s169 + $0x204] sm:$0xf]
        %v302 = vld [vmem:[%s169 + $0x208] sm:$0xf]
        %v303 = vld [vmem:[%s169 + $0x20c] sm:$0xf]
        %v304 = vld [vmem:[%s169 + $0x210] sm:$0xf]
        %v305 = vld [vmem:[%s169 + $0x214] sm:$0xf]
        %v306 = vld [vmem:[%s169 + $0x218] sm:$0xf]
        %v307 = vld [vmem:[%s169 + $0x21c] sm:$0xf]
        %v308 = vld [vmem:[%s169 + $0x220] sm:$0xf]
        %v309 = vld [vmem:[%s169 + $0x224] sm:$0xf]
        %v310 = vld [vmem:[%s169 + $0x228] sm:$0xf]
        %v311 = vld [vmem:[%s169 + $0x22c] sm:$0xf]
        %v312 = vld [vmem:[%s169 + $0x230] sm:$0xf]
        %v313 = vld [vmem:[%s169 + $0x234] sm:$0xf]
        %v314 = vld [vmem:[%s169 + $0x238] sm:$0xf]
        %v315 = vld [vmem:[%s169 + $0x23c] sm:$0xf]
        %v316 = vld [vmem:[%s169 + $0x240] sm:$0xf]
        %v317 = vld [vmem:[%s169 + $0x244] sm:$0xf]
        %v318 = vld [vmem:[%s169 + $0x248] sm:$0xf]
        %v319 = vld [vmem:[%s169 + $0x24c] sm:$0xf]
        %v320 = vld [vmem:[%s169 + $0x250] sm:$0xf]
        %v321 = vld [vmem:[%s169 + $0x254] sm:$0xf]
        %v322 = vld [vmem:[%s169 + $0x258] sm:$0xf]
        %v323 = vld [vmem:[%s169 + $0x25c] sm:$0xf]
        %v324 = vld [vmem:[%s169 + $0x260] sm:$0xf]
        %v325 = vld [vmem:[%s169 + $0x264] sm:$0xf]
        %v326 = vld [vmem:[%s169 + $0x268] sm:$0xf]
        %v327 = vld [vmem:[%s169 + $0x26c] sm:$0xf]
        %v328 = vld [vmem:[%s169 + $0x270] sm:$0xf]
        %v329 = vld [vmem:[%s169 + $0x274] sm:$0xf]
        %v330 = vld [vmem:[%s169 + $0x278] sm:$0xf]
        %v331 = vld [vmem:[%s169 + $0x27c] sm:$0xf]
        %v332 = vld [vmem:[%s169 + $0x280] sm:$0xf]
        %v333 = vld [vmem:[%s169 + $0x284] sm:$0xf]
        %v334 = vld [vmem:[%s169 + $0x288] sm:$0xf]
        %v335 = vld [vmem:[%s169 + $0x28c] sm:$0xf]
        %v336 = vld [vmem:[%s169 + $0x290] sm:$0xf]
        %v337 = vld [vmem:[%s169 + $0x294] sm:$0xf]
        %v338 = vld [vmem:[%s169 + $0x298] sm:$0xf]
        %v339 = vld [vmem:[%s169 + $0x29c] sm:$0xf]
        %v340 = vld [vmem:[%s169 + $0x2a0] sm:$0xf]
        %v341 = vld [vmem:[%s169 + $0x2a4] sm:$0xf]
        %v342 = vld [vmem:[%s169 + $0x2a8] sm:$0xf]
        %v343 = vld [vmem:[%s169 + $0x2ac] sm:$0xf]
        %v344 = vld [vmem:[%s169 + $0x2b0] sm:$0xf]
        %v345 = vld [vmem:[%s169 + $0x2b4] sm:$0xf]
        %v346 = vld [vmem:[%s169 + $0x2b8] sm:$0xf]
        %v347 = vld [vmem:[%s169 + $0x2bc] sm:$0xf]
        %v348 = vld [vmem:[%s169 + $0x2c0] sm:$0xf]
        %v349 = vld [vmem:[%s169 + $0x2c4] sm:$0xf]
        %v350 = vld [vmem:[%s169 + $0x2c8] sm:$0xf]
        %v351 = vld [vmem:[%s169 + $0x2cc] sm:$0xf]
        %v352 = vld [vmem:[%s169 + $0x2d0] sm:$0xf]
        %v353 = vld [vmem:[%s169 + $0x2d4] sm:$0xf]
        %v354 = vld [vmem:[%s169 + $0x2d8] sm:$0xf]
        %v355 = vld [vmem:[%s169 + $0x2dc] sm:$0xf]
        %v356 = vld [vmem:[%s169 + $0x2e0] sm:$0xf]
        %v357 = vld [vmem:[%s169 + $0x2e4] sm:$0xf]
        %v358 = vld [vmem:[%s169 + $0x2e8] sm:$0xf]
        %v359 = vld [vmem:[%s169 + $0x2ec] sm:$0xf]
        %v360 = vld [vmem:[%s169 + $0x2f0] sm:$0xf]
        %v361 = vld [vmem:[%s169 + $0x2f4] sm:$0xf]
        %v362 = vld [vmem:[%s169 + $0x2f8] sm:$0xf]
        %v363 = vld [vmem:[%s169 + $0x2fc] sm:$0xf]
        %v364 = vld [vmem:[%s169 + $0x300] sm:$0xf]
        %v365 = vld [vmem:[%s169 + $0x304] sm:$0xf]
        %v366 = vld [vmem:[%s169 + $0x308] sm:$0xf]
        %v367 = vld [vmem:[%s169 + $0x30c] sm:$0xf]
        %v368 = vld [vmem:[%s169 + $0x310] sm:$0xf]
        %v369 = vld [vmem:[%s169 + $0x314] sm:$0xf]
        %v370 = vld [vmem:[%s169 + $0x318] sm:$0xf]
        %v371 = vld [vmem:[%s169 + $0x31c] sm:$0xf]
        %v372 = vld [vmem:[%s169 + $0x320] sm:$0xf]
        %v373 = vld [vmem:[%s169 + $0x324] sm:$0xf]
        %v374 = vld [vmem:[%s169 + $0x328] sm:$0xf]
        %v375 = vld [vmem:[%s169 + $0x32c] sm:$0xf]
        %v376 = vld [vmem:[%s169 + $0x330] sm:$0xf]
        %v377 = vld [vmem:[%s169 + $0x334] sm:$0xf]
        %v378 = vld [vmem:[%s169 + $0x338] sm:$0xf]
        %v379 = vld [vmem:[%s169 + $0x33c] sm:$0xf]
        %v380 = vld [vmem:[%s169 + $0x340] sm:$0xf]
        %v381 = vld [vmem:[%s169 + $0x344] sm:$0xf]
        %v382 = vld [vmem:[%s169 + $0x348] sm:$0xf]
        %v383 = vld [vmem:[%s169 + $0x34c] sm:$0xf]
        %v384 = vld [vmem:[%s169 + $0x350] sm:$0xf]
        %v385 = vld [vmem:[%s169 + $0x354] sm:$0xf]
        %v386 = vld [vmem:[%s169 + $0x358] sm:$0xf]
        %v387 = vld [vmem:[%s169 + $0x35c] sm:$0xf]
        %v388 = vld [vmem:[%s169 + $0x360] sm:$0xf]
        %v389 = vld [vmem:[%s169 + $0x364] sm:$0xf]
        %v390 = vld [vmem:[%s169 + $0x368] sm:$0xf]
        %v391 = vld [vmem:[%s169 + $0x36c] sm:$0xf]
        %v392 = vld [vmem:[%s169 + $0x370] sm:$0xf]
        %v393 = vld [vmem:[%s169 + $0x374] sm:$0xf]
        %v394 = vld [vmem:[%s169 + $0x378] sm:$0xf]
        %v395 = vld [vmem:[%s169 + $0x37c] sm:$0xf]
        %v396 = vld [vmem:[%s169 + $0x380] sm:$0xf]
        %v397 = vld [vmem:[%s169 + $0x384] sm:$0xf]
        %v398 = vld [vmem:[%s169 + $0x388] sm:$0xf]
        %v399 = vld [vmem:[%s169 + $0x38c] sm:$0xf]
        %v400 = vld [vmem:[%s169 + $0x390] sm:$0xf]
        %v401 = vld [vmem:[%s169 + $0x394] sm:$0xf]
        %v402 = vld [vmem:[%s169 + $0x398] sm:$0xf]
        %v403 = vld [vmem:[%s169 + $0x39c] sm:$0xf]
        %v404 = vld [vmem:[%s169 + $0x3a0] sm:$0xf]
        %v405 = vld [vmem:[%s169 + $0x3a4] sm:$0xf]
        %v406 = vld [vmem:[%s169 + $0x3a8] sm:$0xf]
        %v407 = vld [vmem:[%s169 + $0x3ac] sm:$0xf]
        %v408 = vld [vmem:[%s169 + $0x3b0] sm:$0xf]
        %v409 = vld [vmem:[%s169 + $0x3b4] sm:$0xf]
        %v410 = vld [vmem:[%s169 + $0x3b8] sm:$0xf]
        %v411 = vld [vmem:[%s169 + $0x3bc] sm:$0xf]
        %v412 = vld [vmem:[%s169 + $0x3c0] sm:$0xf]
        %v413 = vld [vmem:[%s169 + $0x3c4] sm:$0xf]
        %v414 = vld [vmem:[%s169 + $0x3c8] sm:$0xf]
        %v415 = vld [vmem:[%s169 + $0x3cc] sm:$0xf]
        %v416 = vld [vmem:[%s169 + $0x3d0] sm:$0xf]
        %v417 = vld [vmem:[%s169 + $0x3d4] sm:$0xf]
        %v418 = vld [vmem:[%s169 + $0x3d8] sm:$0xf]
        %v419 = vld [vmem:[%s169 + $0x3dc] sm:$0xf]
        %v420 = vld [vmem:[%s169 + $0x3e0] sm:$0xf]
        %v421 = vld [vmem:[%s169 + $0x3e4] sm:$0xf]
        %v422 = vld [vmem:[%s169 + $0x3e8] sm:$0xf]
        %v423 = vld [vmem:[%s169 + $0x3ec] sm:$0xf]
        %v424 = vld [vmem:[%s169 + $0x3f0] sm:$0xf]
        %v425 = vld [vmem:[%s169 + $0x3f4] sm:$0xf]
        %v426 = vld [vmem:[%s169 + $0x3f8] sm:$0xf]
        %v427 = vld [vmem:[%s169 + $0x3fc] sm:$0xf]
        %v428 = vld [vmem:[%s1] sm:$0xf]
        %v429 = vld [vmem:[%s1 + $0x4] sm:$0xf]
        %v430 = vld [vmem:[%s1 + $0x8] sm:$0xf]
        %v431 = vld [vmem:[%s1 + $0xc] sm:$0xf]
        %v432 = vld [vmem:[%s2] sm:$0x1]
        %v434 = vlaneseq
        %v435 = vshrl.u32 %v434, 7
        %v436 = vsub.s32 0, %v435
        %v437 = vrot.slane %v432, %v436
        %v695 = vunpack.c.l.b16 %v172
        %v696 = vunpack.c.l.b16 %v173
        %v697 = vunpack.c.l.b16 %v174
        %v698 = vunpack.c.l.b16 %v175
        %v699 = vunpack.c.l.b16 %v176
        %v700 = vunpack.c.l.b16 %v177
        %v701 = vunpack.c.l.b16 %v178
        %v702 = vunpack.c.l.b16 %v179
        %v703 = vunpack.c.l.b16 %v180
        %v704 = vunpack.c.l.b16 %v181
        %v705 = vunpack.c.l.b16 %v182
        %v706 = vunpack.c.l.b16 %v183
        %v707 = vunpack.c.l.b16 %v184
        %v708 = vunpack.c.l.b16 %v185
        %v709 = vunpack.c.l.b16 %v186
        %v710 = vunpack.c.l.b16 %v187
        %v711 = vunpack.c.l.b16 %v188
        %v712 = vunpack.c.l.b16 %v189
        %v713 = vunpack.c.l.b16 %v190
        %v714 = vunpack.c.l.b16 %v191
        %v715 = vunpack.c.l.b16 %v192
        %v716 = vunpack.c.l.b16 %v193
        %v717 = vunpack.c.l.b16 %v194
        %v718 = vunpack.c.l.b16 %v195
        %v719 = vunpack.c.l.b16 %v196
        %v720 = vunpack.c.l.b16 %v197
        %v721 = vunpack.c.l.b16 %v198
        %v722 = vunpack.c.l.b16 %v199
        %v723 = vunpack.c.l.b16 %v200
        %v724 = vunpack.c.l.b16 %v201
        %v725 = vunpack.c.l.b16 %v202
        %v726 = vunpack.c.l.b16 %v203
        %v727 = vunpack.c.l.b16 %v204
        %v728 = vunpack.c.l.b16 %v205
        %v729 = vunpack.c.l.b16 %v206
        %v730 = vunpack.c.l.b16 %v207
        %v731 = vunpack.c.l.b16 %v208
        %v732 = vunpack.c.l.b16 %v209
        %v733 = vunpack.c.l.b16 %v210
        %v734 = vunpack.c.l.b16 %v211
        %v735 = vunpack.c.l.b16 %v212
        %v736 = vunpack.c.l.b16 %v213
        %v737 = vunpack.c.l.b16 %v214
        %v738 = vunpack.c.l.b16 %v215
        %v739 = vunpack.c.l.b16 %v216
        %v740 = vunpack.c.l.b16 %v217
        %v741 = vunpack.c.l.b16 %v218
        %v742 = vunpack.c.l.b16 %v219
        %v743 = vunpack.c.l.b16 %v220
        %v744 = vunpack.c.l.b16 %v221
        %v745 = vunpack.c.l.b16 %v222
        %v746 = vunpack.c.l.b16 %v223
        %v747 = vunpack.c.l.b16 %v224
        %v748 = vunpack.c.l.b16 %v225
        %v749 = vunpack.c.l.b16 %v226
        %v750 = vunpack.c.l.b16 %v227
        %v751 = vunpack.c.l.b16 %v228
        %v752 = vunpack.c.l.b16 %v229
        %v753 = vunpack.c.l.b16 %v230
        %v754 = vunpack.c.l.b16 %v231
        %v755 = vunpack.c.l.b16 %v232
        %v756 = vunpack.c.l.b16 %v233
        %v757 = vunpack.c.l.b16 %v234
        %v758 = vunpack.c.l.b16 %v235
        %v759 = vunpack.c.l.b16 %v236
        %v760 = vunpack.c.l.b16 %v237
        %v761 = vunpack.c.l.b16 %v238
        %v762 = vunpack.c.l.b16 %v239
        %v763 = vunpack.c.l.b16 %v240
        %v764 = vunpack.c.l.b16 %v241
        %v765 = vunpack.c.l.b16 %v242
        %v766 = vunpack.c.l.b16 %v243
        %v767 = vunpack.c.l.b16 %v244
        %v768 = vunpack.c.l.b16 %v245
        %v769 = vunpack.c.l.b16 %v246
        %v770 = vunpack.c.l.b16 %v247
        %v771 = vunpack.c.l.b16 %v248
        %v772 = vunpack.c.l.b16 %v249
        %v773 = vunpack.c.l.b16 %v250
        %v774 = vunpack.c.l.b16 %v251
        %v775 = vunpack.c.l.b16 %v252
        %v776 = vunpack.c.l.b16 %v253
        %v777 = vunpack.c.l.b16 %v254
        %v778 = vunpack.c.l.b16 %v255
        %v779 = vunpack.c.l.b16 %v256
        %v780 = vunpack.c.l.b16 %v257
        %v781 = vunpack.c.l.b16 %v258
        %v782 = vunpack.c.l.b16 %v259
        %v783 = vunpack.c.l.b16 %v260
        %v784 = vunpack.c.l.b16 %v261
        %v785 = vunpack.c.l.b16 %v262
        %v786 = vunpack.c.l.b16 %v263
        %v787 = vunpack.c.l.b16 %v264
        %v788 = vunpack.c.l.b16 %v265
        %v789 = vunpack.c.l.b16 %v266
        %v790 = vunpack.c.l.b16 %v267
        %v791 = vunpack.c.l.b16 %v268
        %v792 = vunpack.c.l.b16 %v269
        %v793 = vunpack.c.l.b16 %v270
        %v794 = vunpack.c.l.b16 %v271
        %v795 = vunpack.c.l.b16 %v272
        %v796 = vunpack.c.l.b16 %v273
        %v797 = vunpack.c.l.b16 %v274
        %v798 = vunpack.c.l.b16 %v275
        %v799 = vunpack.c.l.b16 %v276
        %v800 = vunpack.c.l.b16 %v277
        %v801 = vunpack.c.l.b16 %v278
        %v802 = vunpack.c.l.b16 %v279
        %v803 = vunpack.c.l.b16 %v280
        %v804 = vunpack.c.l.b16 %v281
        %v805 = vunpack.c.l.b16 %v282
        %v806 = vunpack.c.l.b16 %v283
        %v807 = vunpack.c.l.b16 %v284
        %v808 = vunpack.c.l.b16 %v285
        %v809 = vunpack.c.l.b16 %v286
        %v810 = vunpack.c.l.b16 %v287
        %v811 = vunpack.c.l.b16 %v288
        %v812 = vunpack.c.l.b16 %v289
        %v813 = vunpack.c.l.b16 %v290
        %v814 = vunpack.c.l.b16 %v291
        %v815 = vunpack.c.l.b16 %v292
        %v816 = vunpack.c.l.b16 %v293
        %v817 = vunpack.c.l.b16 %v294
        %v818 = vunpack.c.l.b16 %v295
        %v819 = vunpack.c.l.b16 %v296
        %v820 = vunpack.c.l.b16 %v297
        %v821 = vunpack.c.l.b16 %v298
        %v822 = vunpack.c.l.b16 %v299
        %v823 = vunpack.c.l.b16 %v300
        %v824 = vunpack.c.l.b16 %v301
        %v825 = vunpack.c.l.b16 %v302
        %v826 = vunpack.c.l.b16 %v303
        %v827 = vunpack.c.l.b16 %v304
        %v828 = vunpack.c.l.b16 %v305
        %v829 = vunpack.c.l.b16 %v306
        %v830 = vunpack.c.l.b16 %v307
        %v831 = vunpack.c.l.b16 %v308
        %v832 = vunpack.c.l.b16 %v309
        %v833 = vunpack.c.l.b16 %v310
        %v834 = vunpack.c.l.b16 %v311
        %v835 = vunpack.c.l.b16 %v312
        %v836 = vunpack.c.l.b16 %v313
        %v837 = vunpack.c.l.b16 %v314
        %v838 = vunpack.c.l.b16 %v315
        %v839 = vunpack.c.l.b16 %v316
        %v840 = vunpack.c.l.b16 %v317
        %v841 = vunpack.c.l.b16 %v318
        %v842 = vunpack.c.l.b16 %v319
        %v843 = vunpack.c.l.b16 %v320
        %v844 = vunpack.c.l.b16 %v321
        %v845 = vunpack.c.l.b16 %v322
        %v846 = vunpack.c.l.b16 %v323
        %v847 = vunpack.c.l.b16 %v324
        %v848 = vunpack.c.l.b16 %v325
        %v849 = vunpack.c.l.b16 %v326
        %v850 = vunpack.c.l.b16 %v327
        %v851 = vunpack.c.l.b16 %v328
        %v852 = vunpack.c.l.b16 %v329
        %v853 = vunpack.c.l.b16 %v330
        %v854 = vunpack.c.l.b16 %v331
        %v855 = vunpack.c.l.b16 %v332
        %v856 = vunpack.c.l.b16 %v333
        %v857 = vunpack.c.l.b16 %v334
        %v858 = vunpack.c.l.b16 %v335
        %v859 = vunpack.c.l.b16 %v336
        %v860 = vunpack.c.l.b16 %v337
        %v861 = vunpack.c.l.b16 %v338
        %v862 = vunpack.c.l.b16 %v339
        %v863 = vunpack.c.l.b16 %v340
        %v864 = vunpack.c.l.b16 %v341
        %v865 = vunpack.c.l.b16 %v342
        %v866 = vunpack.c.l.b16 %v343
        %v867 = vunpack.c.l.b16 %v344
        %v868 = vunpack.c.l.b16 %v345
        %v869 = vunpack.c.l.b16 %v346
        %v870 = vunpack.c.l.b16 %v347
        %v871 = vunpack.c.l.b16 %v348
        %v872 = vunpack.c.l.b16 %v349
        %v873 = vunpack.c.l.b16 %v350
        %v874 = vunpack.c.l.b16 %v351
        %v875 = vunpack.c.l.b16 %v352
        %v876 = vunpack.c.l.b16 %v353
        %v877 = vunpack.c.l.b16 %v354
        %v878 = vunpack.c.l.b16 %v355
        %v879 = vunpack.c.l.b16 %v356
        %v880 = vunpack.c.l.b16 %v357
        %v881 = vunpack.c.l.b16 %v358
        %v882 = vunpack.c.l.b16 %v359
        %v883 = vunpack.c.l.b16 %v360
        %v884 = vunpack.c.l.b16 %v361
        %v885 = vunpack.c.l.b16 %v362
        %v886 = vunpack.c.l.b16 %v363
        %v887 = vunpack.c.l.b16 %v364
        %v888 = vunpack.c.l.b16 %v365
        %v889 = vunpack.c.l.b16 %v366
        %v890 = vunpack.c.l.b16 %v367
        %v891 = vunpack.c.l.b16 %v368
        %v892 = vunpack.c.l.b16 %v369
        %v893 = vunpack.c.l.b16 %v370
        %v894 = vunpack.c.l.b16 %v371
        %v895 = vunpack.c.l.b16 %v372
        %v896 = vunpack.c.l.b16 %v373
        %v897 = vunpack.c.l.b16 %v374
        %v898 = vunpack.c.l.b16 %v375
        %v899 = vunpack.c.l.b16 %v376
        %v900 = vunpack.c.l.b16 %v377
        %v901 = vunpack.c.l.b16 %v378
        %v902 = vunpack.c.l.b16 %v379
        %v903 = vunpack.c.l.b16 %v380
        %v904 = vunpack.c.l.b16 %v381
        %v905 = vunpack.c.l.b16 %v382
        %v906 = vunpack.c.l.b16 %v383
        %v907 = vunpack.c.l.b16 %v384
        %v908 = vunpack.c.l.b16 %v385
        %v909 = vunpack.c.l.b16 %v386
        %v910 = vunpack.c.l.b16 %v387
        %v911 = vunpack.c.l.b16 %v388
        %v912 = vunpack.c.l.b16 %v389
        %v913 = vunpack.c.l.b16 %v390
        %v914 = vunpack.c.l.b16 %v391
        %v915 = vunpack.c.l.b16 %v392
        %v916 = vunpack.c.l.b16 %v393
        %v917 = vunpack.c.l.b16 %v394
        %v918 = vunpack.c.l.b16 %v395
        %v919 = vunpack.c.l.b16 %v396
        %v920 = vunpack.c.l.b16 %v397
        %v921 = vunpack.c.l.b16 %v398
        %v922 = vunpack.c.l.b16 %v399
        %v923 = vunpack.c.l.b16 %v400
        %v924 = vunpack.c.l.b16 %v401
        %v925 = vunpack.c.l.b16 %v402
        %v926 = vunpack.c.l.b16 %v403
        %v927 = vunpack.c.l.b16 %v404
        %v928 = vunpack.c.l.b16 %v405
        %v929 = vunpack.c.l.b16 %v406
        %v930 = vunpack.c.l.b16 %v407
        %v931 = vunpack.c.l.b16 %v408
        %v932 = vunpack.c.l.b16 %v409
        %v933 = vunpack.c.l.b16 %v410
        %v934 = vunpack.c.l.b16 %v411
        %v935 = vunpack.c.l.b16 %v412
        %v936 = vunpack.c.l.b16 %v413
        %v937 = vunpack.c.l.b16 %v414
        %v938 = vunpack.c.l.b16 %v415
        %v939 = vunpack.c.l.b16 %v416
        %v940 = vunpack.c.l.b16 %v417
        %v941 = vunpack.c.l.b16 %v418
        %v942 = vunpack.c.l.b16 %v419
        %v943 = vunpack.c.l.b16 %v420
        %v944 = vunpack.c.l.b16 %v421
        %v945 = vunpack.c.l.b16 %v422
        %v946 = vunpack.c.l.b16 %v423
        %v947 = vunpack.c.l.b16 %v424
        %v948 = vunpack.c.l.b16 %v425
        %v949 = vunpack.c.l.b16 %v426
        %v950 = vunpack.c.l.b16 %v427
        %v951 = vpack.c.b16 %v696, %v695
        %v952 = vpack.c.b16 %v698, %v697
        %v953 = vpack.c.b16 %v700, %v699
        %v954 = vpack.c.b16 %v702, %v701
        %v955 = vpack.c.b16 %v704, %v703
        %v956 = vpack.c.b16 %v706, %v705
        %v957 = vpack.c.b16 %v708, %v707
        %v958 = vpack.c.b16 %v710, %v709
        %v959 = vpack.c.b16 %v712, %v711
        %v960 = vpack.c.b16 %v714, %v713
        %v961 = vpack.c.b16 %v716, %v715
        %v962 = vpack.c.b16 %v718, %v717
        %v963 = vpack.c.b16 %v720, %v719
        %v964 = vpack.c.b16 %v722, %v721
        %v965 = vpack.c.b16 %v724, %v723
        %v966 = vpack.c.b16 %v726, %v725
        %v967 = vpack.c.b16 %v728, %v727
        %v968 = vpack.c.b16 %v730, %v729
        %v969 = vpack.c.b16 %v732, %v731
        %v970 = vpack.c.b16 %v734, %v733
        %v971 = vpack.c.b16 %v736, %v735
        %v972 = vpack.c.b16 %v738, %v737
        %v973 = vpack.c.b16 %v740, %v739
        %v974 = vpack.c.b16 %v742, %v741
        %v975 = vpack.c.b16 %v744, %v743
        %v976 = vpack.c.b16 %v746, %v745
        %v977 = vpack.c.b16 %v748, %v747
        %v978 = vpack.c.b16 %v750, %v749
        %v979 = vpack.c.b16 %v752, %v751
        %v980 = vpack.c.b16 %v754, %v753
        %v981 = vpack.c.b16 %v756, %v755
        %v982 = vpack.c.b16 %v758, %v757
        %v983 = vpack.c.b16 %v760, %v759
        %v984 = vpack.c.b16 %v762, %v761
        %v985 = vpack.c.b16 %v764, %v763
        %v986 = vpack.c.b16 %v766, %v765
        %v987 = vpack.c.b16 %v768, %v767
        %v988 = vpack.c.b16 %v770, %v769
        %v989 = vpack.c.b16 %v772, %v771
        %v990 = vpack.c.b16 %v774, %v773
        %v991 = vpack.c.b16 %v776, %v775
        %v992 = vpack.c.b16 %v778, %v777
        %v993 = vpack.c.b16 %v780, %v779
        %v994 = vpack.c.b16 %v782, %v781
        %v995 = vpack.c.b16 %v784, %v783
        %v996 = vpack.c.b16 %v786, %v785
        %v997 = vpack.c.b16 %v788, %v787
        %v998 = vpack.c.b16 %v790, %v789
        %v999 = vpack.c.b16 %v792, %v791
        %v1000 = vpack.c.b16 %v794, %v793
        %v1001 = vpack.c.b16 %v796, %v795
        %v1002 = vpack.c.b16 %v798, %v797
        %v1003 = vpack.c.b16 %v800, %v799
        %v1004 = vpack.c.b16 %v802, %v801
        %v1005 = vpack.c.b16 %v804, %v803
        %v1006 = vpack.c.b16 %v806, %v805
        %v1007 = vpack.c.b16 %v808, %v807
        %v1008 = vpack.c.b16 %v810, %v809
        %v1009 = vpack.c.b16 %v812, %v811
        %v1010 = vpack.c.b16 %v814, %v813
        %v1011 = vpack.c.b16 %v816, %v815
        %v1012 = vpack.c.b16 %v818, %v817
        %v1013 = vpack.c.b16 %v820, %v819
        %v1014 = vpack.c.b16 %v822, %v821
        %v1015 = vpack.c.b16 %v824, %v823
        %v1016 = vpack.c.b16 %v826, %v825
        %v1017 = vpack.c.b16 %v828, %v827
        %v1018 = vpack.c.b16 %v830, %v829
        %v1019 = vpack.c.b16 %v832, %v831
        %v1020 = vpack.c.b16 %v834, %v833
        %v1021 = vpack.c.b16 %v836, %v835
        %v1022 = vpack.c.b16 %v838, %v837
        %v1023 = vpack.c.b16 %v840, %v839
        %v1024 = vpack.c.b16 %v842, %v841
        %v1025 = vpack.c.b16 %v844, %v843
        %v1026 = vpack.c.b16 %v846, %v845
        %v1027 = vpack.c.b16 %v848, %v847
        %v1028 = vpack.c.b16 %v850, %v849
        %v1029 = vpack.c.b16 %v852, %v851
        %v1030 = vpack.c.b16 %v854, %v853
        %v1031 = vpack.c.b16 %v856, %v855
        %v1032 = vpack.c.b16 %v858, %v857
        %v1033 = vpack.c.b16 %v860, %v859
        %v1034 = vpack.c.b16 %v862, %v861
        %v1035 = vpack.c.b16 %v864, %v863
        %v1036 = vpack.c.b16 %v866, %v865
        %v1037 = vpack.c.b16 %v868, %v867
        %v1038 = vpack.c.b16 %v870, %v869
        %v1039 = vpack.c.b16 %v872, %v871
        %v1040 = vpack.c.b16 %v874, %v873
        %v1041 = vpack.c.b16 %v876, %v875
        %v1042 = vpack.c.b16 %v878, %v877
        %v1043 = vpack.c.b16 %v880, %v879
        %v1044 = vpack.c.b16 %v882, %v881
        %v1045 = vpack.c.b16 %v884, %v883
        %v1046 = vpack.c.b16 %v886, %v885
        %v1047 = vpack.c.b16 %v888, %v887
        %v1048 = vpack.c.b16 %v890, %v889
        %v1049 = vpack.c.b16 %v892, %v891
        %v1050 = vpack.c.b16 %v894, %v893
        %v1051 = vpack.c.b16 %v896, %v895
        %v1052 = vpack.c.b16 %v898, %v897
        %v1053 = vpack.c.b16 %v900, %v899
        %v1054 = vpack.c.b16 %v902, %v901
        %v1055 = vpack.c.b16 %v904, %v903
        %v1056 = vpack.c.b16 %v906, %v905
        %v1057 = vpack.c.b16 %v908, %v907
        %v1058 = vpack.c.b16 %v910, %v909
        %v1059 = vpack.c.b16 %v912, %v911
        %v1060 = vpack.c.b16 %v914, %v913
        %v1061 = vpack.c.b16 %v916, %v915
        %v1062 = vpack.c.b16 %v918, %v917
        %v1063 = vpack.c.b16 %v920, %v919
        %v1064 = vpack.c.b16 %v922, %v921
        %v1065 = vpack.c.b16 %v924, %v923
        %v1066 = vpack.c.b16 %v926, %v925
        %v1067 = vpack.c.b16 %v928, %v927
        %v1068 = vpack.c.b16 %v930, %v929
        %v1069 = vpack.c.b16 %v932, %v931
        %v1070 = vpack.c.b16 %v934, %v933
        %v1071 = vpack.c.b16 %v936, %v935
        %v1072 = vpack.c.b16 %v938, %v937
        %v1073 = vpack.c.b16 %v940, %v939
        %v1074 = vpack.c.b16 %v942, %v941
        %v1075 = vpack.c.b16 %v944, %v943
        %v1076 = vpack.c.b16 %v946, %v945
        %v1077 = vpack.c.b16 %v948, %v947
        %v1078 = vpack.c.b16 %v950, %v949
        %v1083 = vunpack.c.l.b16 %v428
        %v1084 = vunpack.c.l.b16 %v429
        %v1085 = vunpack.c.l.b16 %v430
        %v1086 = vunpack.c.l.b16 %v431
        %v1087 = vpack.c.b16 %v1084, %v1083
        %v1088 = vpack.c.b16 %v1086, %v1085
        %vm1091 = vcmask 261120
        %v1093 = vsel %vm1091, %v951, 0
        %v1096 = vsel %vm1091, %v952, 0
        %v1099 = vsel %vm1091, %v953, 0
        %v1102 = vsel %vm1091, %v954, 0
        %v1105 = vsel %vm1091, %v955, 0
        %v1108 = vsel %vm1091, %v956, 0
        %v1111 = vsel %vm1091, %v957, 0
        %v1114 = vsel %vm1091, %v958, 0
        %v1117 = vsel %vm1091, %v959, 0
        %v1120 = vsel %vm1091, %v960, 0
        %v1123 = vsel %vm1091, %v961, 0
        %v1126 = vsel %vm1091, %v962, 0
        %v1129 = vsel %vm1091, %v963, 0
        %v1132 = vsel %vm1091, %v964, 0
        %v1135 = vsel %vm1091, %v965, 0
        %v1138 = vsel %vm1091, %v966, 0
        %v1141 = vsel %vm1091, %v967, 0
        %v1144 = vsel %vm1091, %v968, 0
        %v1147 = vsel %vm1091, %v969, 0
        %v1150 = vsel %vm1091, %v970, 0
        %v1153 = vsel %vm1091, %v971, 0
        %v1156 = vsel %vm1091, %v972, 0
        %v1159 = vsel %vm1091, %v973, 0
        %v1162 = vsel %vm1091, %v974, 0
        %v1165 = vsel %vm1091, %v975, 0
        %v1168 = vsel %vm1091, %v976, 0
        %v1171 = vsel %vm1091, %v977, 0
        %v1174 = vsel %vm1091, %v978, 0
        %v1177 = vsel %vm1091, %v979, 0
        %v1180 = vsel %vm1091, %v980, 0
        %v1183 = vsel %vm1091, %v981, 0
        %v1186 = vsel %vm1091, %v982, 0
        %v1189 = vsel %vm1091, %v983, 0
        %v1192 = vsel %vm1091, %v984, 0
        %v1195 = vsel %vm1091, %v985, 0
        %v1198 = vsel %vm1091, %v986, 0
        %v1201 = vsel %vm1091, %v987, 0
        %v1204 = vsel %vm1091, %v988, 0
        %v1207 = vsel %vm1091, %v989, 0
        %v1210 = vsel %vm1091, %v990, 0
        %v1213 = vsel %vm1091, %v991, 0
        %v1216 = vsel %vm1091, %v992, 0
        %v1219 = vsel %vm1091, %v993, 0
        %v1222 = vsel %vm1091, %v994, 0
        %v1225 = vsel %vm1091, %v995, 0
        %v1228 = vsel %vm1091, %v996, 0
        %v1231 = vsel %vm1091, %v997, 0
        %v1234 = vsel %vm1091, %v998, 0
        %v1237 = vsel %vm1091, %v999, 0
        %v1240 = vsel %vm1091, %v1000, 0
        %v1243 = vsel %vm1091, %v1001, 0
        %v1246 = vsel %vm1091, %v1002, 0
        %v1249 = vsel %vm1091, %v1003, 0
        %v1252 = vsel %vm1091, %v1004, 0
        %v1255 = vsel %vm1091, %v1005, 0
        %v1258 = vsel %vm1091, %v1006, 0
        %v1261 = vsel %vm1091, %v1007, 0
        %v1264 = vsel %vm1091, %v1008, 0
        %v1267 = vsel %vm1091, %v1009, 0
        %v1270 = vsel %vm1091, %v1010, 0
        %v1273 = vsel %vm1091, %v1011, 0
        %v1276 = vsel %vm1091, %v1012, 0
        %v1279 = vsel %vm1091, %v1013, 0
        %v1282 = vsel %vm1091, %v1014, 0
        %v1285 = vsel %vm1091, %v1015, 0
        %v1288 = vsel %vm1091, %v1016, 0
        %v1291 = vsel %vm1091, %v1017, 0
        %v1294 = vsel %vm1091, %v1018, 0
        %v1297 = vsel %vm1091, %v1019, 0
        %v1300 = vsel %vm1091, %v1020, 0
        %v1303 = vsel %vm1091, %v1021, 0
        %v1306 = vsel %vm1091, %v1022, 0
        %v1309 = vsel %vm1091, %v1023, 0
        %v1312 = vsel %vm1091, %v1024, 0
        %v1315 = vsel %vm1091, %v1025, 0
        %v1318 = vsel %vm1091, %v1026, 0
        %v1321 = vsel %vm1091, %v1027, 0
        %v1324 = vsel %vm1091, %v1028, 0
        %v1327 = vsel %vm1091, %v1029, 0
        %v1330 = vsel %vm1091, %v1030, 0
        %v1333 = vsel %vm1091, %v1031, 0
        %v1336 = vsel %vm1091, %v1032, 0
        %v1339 = vsel %vm1091, %v1033, 0
        %v1342 = vsel %vm1091, %v1034, 0
        %v1345 = vsel %vm1091, %v1035, 0
        %v1348 = vsel %vm1091, %v1036, 0
        %v1351 = vsel %vm1091, %v1037, 0
        %v1354 = vsel %vm1091, %v1038, 0
        %v1357 = vsel %vm1091, %v1039, 0
        %v1360 = vsel %vm1091, %v1040, 0
        %v1363 = vsel %vm1091, %v1041, 0
        %v1366 = vsel %vm1091, %v1042, 0
        %v1369 = vsel %vm1091, %v1043, 0
        %v1372 = vsel %vm1091, %v1044, 0
        %v1375 = vsel %vm1091, %v1045, 0
        %v1378 = vsel %vm1091, %v1046, 0
        %v1381 = vsel %vm1091, %v1047, 0
        %v1384 = vsel %vm1091, %v1048, 0
        %v1387 = vsel %vm1091, %v1049, 0
        %v1390 = vsel %vm1091, %v1050, 0
        %v1393 = vsel %vm1091, %v1051, 0
        %v1396 = vsel %vm1091, %v1052, 0
        %v1399 = vsel %vm1091, %v1053, 0
        %v1402 = vsel %vm1091, %v1054, 0
        %v1405 = vsel %vm1091, %v1055, 0
        %v1408 = vsel %vm1091, %v1056, 0
        %v1411 = vsel %vm1091, %v1057, 0
        %v1414 = vsel %vm1091, %v1058, 0
        %v1417 = vsel %vm1091, %v1059, 0
        %v1420 = vsel %vm1091, %v1060, 0
        %v1423 = vsel %vm1091, %v1061, 0
        %v1426 = vsel %vm1091, %v1062, 0
        %v1429 = vsel %vm1091, %v1063, 0
        %v1432 = vsel %vm1091, %v1064, 0
        %v1435 = vsel %vm1091, %v1065, 0
        %v1438 = vsel %vm1091, %v1066, 0
        %v1441 = vsel %vm1091, %v1067, 0
        %v1444 = vsel %vm1091, %v1068, 0
        %v1447 = vsel %vm1091, %v1069, 0
        %v1450 = vsel %vm1091, %v1070, 0
        %v1453 = vsel %vm1091, %v1071, 0
        %v1456 = vsel %vm1091, %v1072, 0
        %v1459 = vsel %vm1091, %v1073, 0
        %v1462 = vsel %vm1091, %v1074, 0
        %v1465 = vsel %vm1091, %v1075, 0
        %v1468 = vsel %vm1091, %v1076, 0
        %v1471 = vsel %vm1091, %v1077, 0
        %v1474 = vsel %vm1091, %v1078, 0
        %1476 = vmatprep.subr.bf16.mxu0 0
        %1477 = vmatpush1.bf16.msra.mxu0 %v1087
        %1478 = vmatprep.subr.bf16.mxu0 0
        %1479 = vmatpush1.bf16.msra.mxu0 %v1088
        %1480 = vmatprep.subr.bf16.mxu0 0
        %1481 = vmatpush1.bf16.msra.mxu0 0
        %1482 = vmatprep.subr.bf16.mxu0 0
        %1483 = vmatpush1.bf16.msra.mxu0 0
        %1484 = vmatprep.subr.bf16.mxu0 0
        %1485 = vmatpush1.bf16.msra.mxu0 0
        %1486 = vmatprep.subr.bf16.mxu0 0
        %1487 = vmatpush1.bf16.msra.mxu0 0
        %1488 = vmatprep.subr.bf16.mxu0 0
        %1489 = vmatpush1.bf16.msra.mxu0 0
        %1490 = vmatprep.subr.bf16.mxu0 0
        %1491 = vmatpush1.bf16.msra.mxu0 0
        %1492 = vmatprep.subr.bf16.mxu0 0
        %1493 = vmatpush1.bf16.msra.mxu0 0
        %1494 = vmatprep.subr.bf16.mxu0 0
        %1495 = vmatpush1.bf16.msra.mxu0 0
        %1496 = vmatprep.subr.bf16.mxu0 0
        %1497 = vmatpush1.bf16.msra.mxu0 0
        %1498 = vmatprep.subr.bf16.mxu0 0
        %1499 = vmatpush1.bf16.msra.mxu0 0
        %1500 = vmatprep.subr.bf16.mxu0 0
        %1501 = vmatpush1.bf16.msra.mxu0 0
        %1502 = vmatprep.subr.bf16.mxu0 0
        %1503 = vmatpush1.bf16.msra.mxu0 0
        %1504 = vmatprep.subr.bf16.mxu0 0
        %1505 = vmatpush1.bf16.msra.mxu0 0
        %1506 = vmatprep.subr.bf16.mxu0 0
        %1507 = vmatpush1.bf16.msra.mxu0 0
        %1508 = vmatprep.mubr.bf16.mxu0 0
        %1509 = vmatmul.mubr.bf16.gmra.mrb[0].mxu0 %v1093
        %v1510 = vpop.f32.mrb[0].mxu0
        %v1511 = vadd.f32 %v437, %v1510
        %v1512 = vpop.f32.mrb[0].mxu0
        %v1513 = vpop.f32.mrb[0].mxu0
        %v1514 = vadd.f32 %v437, %v1513
        %v1515 = vpop.f32.mrb[0].mxu0
        %1516 = vmatprep.mubr.bf16.mxu0 0
        %1517 = vmatmul.mubr.bf16.gmra.mrb[0].mxu0 %v1096
        %v1518 = vpop.f32.mrb[0].mxu0
        %v1519 = vadd.f32 %v437, %v1518
        %v1520 = vpop.f32.mrb[0].mxu0
        %v1521 = vpop.f32.mrb[0].mxu0
        %v1522 = vadd.f32 %v437, %v1521
        %v1523 = vpop.f32.mrb[0].mxu0
        %1524 = vmatprep.mubr.bf16.mxu0 0
        %1525 = vmatmul.mubr.bf16.gmra.mrb[0].mxu0 %v1099
        %v1526 = vpop.f32.mrb[0].mxu0
        %v1527 = vadd.f32 %v437, %v1526
        %v1528 = vpop.f32.mrb[0].mxu0
        %v1529 = vpop.f32.mrb[0].mxu0
        %v1530 = vadd.f32 %v437, %v1529
        %v1531 = vpop.f32.mrb[0].mxu0
        %1532 = vmatprep.mubr.bf16.mxu0 0
        %1533 = vmatmul.mubr.bf16.gmra.mrb[0].mxu0 %v1102
        %v1534 = vpop.f32.mrb[0].mxu0
        %v1535 = vadd.f32 %v437, %v1534
        %v1536 = vpop.f32.mrb[0].mxu0
        %v1537 = vpop.f32.mrb[0].mxu0
        %v1538 = vadd.f32 %v437, %v1537
        %v1539 = vpop.f32.mrb[0].mxu0
        %1540 = vmatprep.mubr.bf16.mxu0 0
        %1541 = vmatmul.mubr.bf16.gmra.mrb[0].mxu0 %v1105
        %v1542 = vpop.f32.mrb[0].mxu0
        %v1543 = vadd.f32 %v437, %v1542
        %v1544 = vpop.f32.mrb[0].mxu0
        %v1545 = vpop.f32.mrb[0].mxu0
        %v1546 = vadd.f32 %v437, %v1545
        %v1547 = vpop.f32.mrb[0].mxu0
        %1548 = vmatprep.mubr.bf16.mxu0 0
        %1549 = vmatmul.mubr.bf16.gmra.mrb[0].mxu0 %v1108
        %v1550 = vpop.f32.mrb[0].mxu0
        %v1551 = vadd.f32 %v437, %v1550
        %v1552 = vpop.f32.mrb[0].mxu0
        %v1553 = vpop.f32.mrb[0].mxu0
        %v1554 = vadd.f32 %v437, %v1553
        %v1555 = vpop.f32.mrb[0].mxu0
        %1556 = vmatprep.mubr.bf16.mxu0 0
        %1557 = vmatmul.mubr.bf16.gmra.mrb[0].mxu0 %v1111
        %v1558 = vpop.f32.mrb[0].mxu0
        %v1559 = vadd.f32 %v437, %v1558
        %v1560 = vpop.f32.mrb[0].mxu0
        %v1561 = vpop.f32.mrb[0].mxu0
        %v1562 = vadd.f32 %v437, %v1561
        %v1563 = vpop.f32.mrb[0].mxu0
        %1564 = vmatprep.mubr.bf16.mxu0 0
        %1565 = vmatmul.mubr.bf16.gmra.mrb[0].mxu0 %v1114
        %v1566 = vpop.f32.mrb[0].mxu0
        %v1567 = vadd.f32 %v437, %v1566
        %v1568 = vpop.f32.mrb[0].mxu0
        %v1569 = vpop.f32.mrb[0].mxu0
        %v1570 = vadd.f32 %v437, %v1569
        %v1571 = vpop.f32.mrb[0].mxu0
        %1572 = vmatprep.mubr.bf16.mxu0 0
        %1573 = vmatmul.mubr.bf16.gmra.mrb[0].mxu0 %v1117
        %v1574 = vpop.f32.mrb[0].mxu0
        %v1575 = vadd.f32 %v437, %v1574
        %v1576 = vpop.f32.mrb[0].mxu0
        %v1577 = vpop.f32.mrb[0].mxu0
        %v1578 = vadd.f32 %v437, %v1577
        %v1579 = vpop.f32.mrb[0].mxu0
        %1580 = vmatprep.mubr.bf16.mxu0 0
        %1581 = vmatmul.mubr.bf16.gmra.mrb[0].mxu0 %v1120
        %v1582 = vpop.f32.mrb[0].mxu0
        %v1583 = vadd.f32 %v437, %v1582
        %v1584 = vpop.f32.mrb[0].mxu0
        %v1585 = vpop.f32.mrb[0].mxu0
        %v1586 = vadd.f32 %v437, %v1585
        %v1587 = vpop.f32.mrb[0].mxu0
        %1588 = vmatprep.mubr.bf16.mxu0 0
        %1589 = vmatmul.mubr.bf16.gmra.mrb[0].mxu0 %v1123
        %v1590 = vpop.f32.mrb[0].mxu0
        %v1591 = vadd.f32 %v437, %v1590
        %v1592 = vpop.f32.mrb[0].mxu0
        %v1593 = vpop.f32.mrb[0].mxu0
        %v1594 = vadd.f32 %v437, %v1593
        %v1595 = vpop.f32.mrb[0].mxu0
        %1596 = vmatprep.mubr.bf16.mxu0 0
        %1597 = vmatmul.mubr.bf16.gmra.mrb[0].mxu0 %v1126
        %v1598 = vpop.f32.mrb[0].mxu0
        %v1599 = vadd.f32 %v437, %v1598
        %v1600 = vpop.f32.mrb[0].mxu0
        %v1601 = vpop.f32.mrb[0].mxu0
        %v1602 = vadd.f32 %v437, %v1601
        %v1603 = vpop.f32.mrb[0].mxu0
        %1604 = vmatprep.mubr.bf16.mxu0 0
        %1605 = vmatmul.mubr.bf16.gmra.mrb[0].mxu0 %v1129
        %v1606 = vpop.f32.mrb[0].mxu0
        %v1607 = vadd.f32 %v437, %v1606
        %v1608 = vpop.f32.mrb[0].mxu0
        %v1609 = vpop.f32.mrb[0].mxu0
        %v1610 = vadd.f32 %v437, %v1609
        %v1611 = vpop.f32.mrb[0].mxu0
        %1612 = vmatprep.mubr.bf16.mxu0 0
        %1613 = vmatmul.mubr.bf16.gmra.mrb[0].mxu0 %v1132
        %v1614 = vpop.f32.mrb[0].mxu0
        %v1615 = vadd.f32 %v437, %v1614
        %v1616 = vpop.f32.mrb[0].mxu0
        %v1617 = vpop.f32.mrb[0].mxu0
        %v1618 = vadd.f32 %v437, %v1617
        %v1619 = vpop.f32.mrb[0].mxu0
        %1620 = vmatprep.mubr.bf16.mxu0 0
        %1621 = vmatmul.mubr.bf16.gmra.mrb[0].mxu0 %v1135
        %v1622 = vpop.f32.mrb[0].mxu0
        %v1623 = vadd.f32 %v437, %v1622
        %v1624 = vpop.f32.mrb[0].mxu0
        %v1625 = vpop.f32.mrb[0].mxu0
        %v1626 = vadd.f32 %v437, %v1625
        %v1627 = vpop.f32.mrb[0].mxu0
        %1628 = vmatprep.mubr.bf16.mxu0 0
        %1629 = vmatmul.mubr.bf16.gmra.mrb[0].mxu0 %v1138
        %v1630 = vpop.f32.mrb[0].mxu0
        %v1631 = vadd.f32 %v437, %v1630
        %v1632 = vpop.f32.mrb[0].mxu0
        %v1633 = vpop.f32.mrb[0].mxu0
        %v1634 = vadd.f32 %v437, %v1633
        %v1635 = vpop.f32.mrb[0].mxu0
        %1636 = vmatprep.mubr.bf16.mxu0 0
        %1637 = vmatmul.mubr.bf16.gmra.mrb[0].mxu0 %v1141
        %v1638 = vpop.f32.mrb[0].mxu0
        %v1639 = vadd.f32 %v437, %v1638
        %v1640 = vpop.f32.mrb[0].mxu0
        %v1641 = vpop.f32.mrb[0].mxu0
        %v1642 = vadd.f32 %v437, %v1641
        %v1643 = vpop.f32.mrb[0].mxu0
        %1644 = vmatprep.mubr.bf16.mxu0 0
        %1645 = vmatmul.mubr.bf16.gmra.mrb[0].mxu0 %v1144
        %v1646 = vpop.f32.mrb[0].mxu0
        %v1647 = vadd.f32 %v437, %v1646
        %v1648 = vpop.f32.mrb[0].mxu0
        %v1649 = vpop.f32.mrb[0].mxu0
        %v1650 = vadd.f32 %v437, %v1649
        %v1651 = vpop.f32.mrb[0].mxu0
        %1652 = vmatprep.mubr.bf16.mxu0 0
        %1653 = vmatmul.mubr.bf16.gmra.mrb[0].mxu0 %v1147
        %v1654 = vpop.f32.mrb[0].mxu0
        %v1655 = vadd.f32 %v437, %v1654
        %v1656 = vpop.f32.mrb[0].mxu0
        %v1657 = vpop.f32.mrb[0].mxu0
        %v1658 = vadd.f32 %v437, %v1657
        %v1659 = vpop.f32.mrb[0].mxu0
        %1660 = vmatprep.mubr.bf16.mxu0 0
        %1661 = vmatmul.mubr.bf16.gmra.mrb[0].mxu0 %v1150
        %v1662 = vpop.f32.mrb[0].mxu0
        %v1663 = vadd.f32 %v437, %v1662
        %v1664 = vpop.f32.mrb[0].mxu0
        %v1665 = vpop.f32.mrb[0].mxu0
        %v1666 = vadd.f32 %v437, %v1665
        %v1667 = vpop.f32.mrb[0].mxu0
        %1668 = vmatprep.mubr.bf16.mxu0 0
        %1669 = vmatmul.mubr.bf16.gmra.mrb[0].mxu0 %v1153
        %v1670 = vpop.f32.mrb[0].mxu0
        %v1671 = vadd.f32 %v437, %v1670
        %v1672 = vpop.f32.mrb[0].mxu0
        %v1673 = vpop.f32.mrb[0].mxu0
        %v1674 = vadd.f32 %v437, %v1673
        %v1675 = vpop.f32.mrb[0].mxu0
        %1676 = vmatprep.mubr.bf16.mxu0 0
        %1677 = vmatmul.mubr.bf16.gmra.mrb[0].mxu0 %v1156
        %v1678 = vpop.f32.mrb[0].mxu0
        %v1679 = vadd.f32 %v437, %v1678
        %v1680 = vpop.f32.mrb[0].mxu0
        %v1681 = vpop.f32.mrb[0].mxu0
        %v1682 = vadd.f32 %v437, %v1681
        %v1683 = vpop.f32.mrb[0].mxu0
        %1684 = vmatprep.mubr.bf16.mxu0 0
        %1685 = vmatmul.mubr.bf16.gmra.mrb[0].mxu0 %v1159
        %v1686 = vpop.f32.mrb[0].mxu0
        %v1687 = vadd.f32 %v437, %v1686
        %v1688 = vpop.f32.mrb[0].mxu0
        %v1689 = vpop.f32.mrb[0].mxu0
        %v1690 = vadd.f32 %v437, %v1689
        %v1691 = vpop.f32.mrb[0].mxu0
        %1692 = vmatprep.mubr.bf16.mxu0 0
        %1693 = vmatmul.mubr.bf16.gmra.mrb[0].mxu0 %v1162
        %v1694 = vpop.f32.mrb[0].mxu0
        %v1695 = vadd.f32 %v437, %v1694
        %v1696 = vpop.f32.mrb[0].mxu0
        %v1697 = vpop.f32.mrb[0].mxu0
        %v1698 = vadd.f32 %v437, %v1697
        %v1699 = vpop.f32.mrb[0].mxu0
        %1700 = vmatprep.mubr.bf16.mxu0 0
        %1701 = vmatmul.mubr.bf16.gmra.mrb[0].mxu0 %v1165
        %v1702 = vpop.f32.mrb[0].mxu0
        %v1703 = vadd.f32 %v437, %v1702
        %v1704 = vpop.f32.mrb[0].mxu0
        %v1705 = vpop.f32.mrb[0].mxu0
        %v1706 = vadd.f32 %v437, %v1705
        %v1707 = vpop.f32.mrb[0].mxu0
        %1708 = vmatprep.mubr.bf16.mxu0 0
        %1709 = vmatmul.mubr.bf16.gmra.mrb[0].mxu0 %v1168
        %v1710 = vpop.f32.mrb[0].mxu0
        %v1711 = vadd.f32 %v437, %v1710
        %v1712 = vpop.f32.mrb[0].mxu0
        %v1713 = vpop.f32.mrb[0].mxu0
        %v1714 = vadd.f32 %v437, %v1713
        %v1715 = vpop.f32.mrb[0].mxu0
        %1716 = vmatprep.mubr.bf16.mxu0 0
        %1717 = vmatmul.mubr.bf16.gmra.mrb[0].mxu0 %v1171
        %v1718 = vpop.f32.mrb[0].mxu0
        %v1719 = vadd.f32 %v437, %v1718
        %v1720 = vpop.f32.mrb[0].mxu0
        %v1721 = vpop.f32.mrb[0].mxu0
        %v1722 = vadd.f32 %v437, %v1721
        %v1723 = vpop.f32.mrb[0].mxu0
        %1724 = vmatprep.mubr.bf16.mxu0 0
        %1725 = vmatmul.mubr.bf16.gmra.mrb[0].mxu0 %v1174
        %v1726 = vpop.f32.mrb[0].mxu0
        %v1727 = vadd.f32 %v437, %v1726
        %v1728 = vpop.f32.mrb[0].mxu0
        %v1729 = vpop.f32.mrb[0].mxu0
        %v1730 = vadd.f32 %v437, %v1729
        %v1731 = vpop.f32.mrb[0].mxu0
        %1732 = vmatprep.mubr.bf16.mxu0 0
        %1733 = vmatmul.mubr.bf16.gmra.mrb[0].mxu0 %v1177
        %v1734 = vpop.f32.mrb[0].mxu0
        %v1735 = vadd.f32 %v437, %v1734
        %v1736 = vpop.f32.mrb[0].mxu0
        %v1737 = vpop.f32.mrb[0].mxu0
        %v1738 = vadd.f32 %v437, %v1737
        %v1739 = vpop.f32.mrb[0].mxu0
        %1740 = vmatprep.mubr.bf16.mxu0 0
        %1741 = vmatmul.mubr.bf16.gmra.mrb[0].mxu0 %v1180
        %v1742 = vpop.f32.mrb[0].mxu0
        %v1743 = vadd.f32 %v437, %v1742
        %v1744 = vpop.f32.mrb[0].mxu0
        %v1745 = vpop.f32.mrb[0].mxu0
        %v1746 = vadd.f32 %v437, %v1745
        %v1747 = vpop.f32.mrb[0].mxu0
        %1748 = vmatprep.mubr.bf16.mxu0 0
        %1749 = vmatmul.mubr.bf16.gmra.mrb[0].mxu0 %v1183
        %v1750 = vpop.f32.mrb[0].mxu0
        %v1751 = vadd.f32 %v437, %v1750
        %v1752 = vpop.f32.mrb[0].mxu0
        %v1753 = vpop.f32.mrb[0].mxu0
        %v1754 = vadd.f32 %v437, %v1753
        %v1755 = vpop.f32.mrb[0].mxu0
        %1756 = vmatprep.mubr.bf16.mxu0 0
        %1757 = vmatmul.mubr.bf16.gmra.mrb[0].mxu0 %v1186
        %v1758 = vpop.f32.mrb[0].mxu0
        %v1759 = vadd.f32 %v437, %v1758
        %v1760 = vpop.f32.mrb[0].mxu0
        %v1761 = vpop.f32.mrb[0].mxu0
        %v1762 = vadd.f32 %v437, %v1761
        %v1763 = vpop.f32.mrb[0].mxu0
        %1764 = vmatprep.mubr.bf16.mxu0 0
        %1765 = vmatmul.mubr.bf16.gmra.mrb[0].mxu0 %v1189
        %v1766 = vpop.f32.mrb[0].mxu0
        %v1767 = vadd.f32 %v437, %v1766
        %v1768 = vpop.f32.mrb[0].mxu0
        %v1769 = vpop.f32.mrb[0].mxu0
        %v1770 = vadd.f32 %v437, %v1769
        %v1771 = vpop.f32.mrb[0].mxu0
        %1772 = vmatprep.mubr.bf16.mxu0 0
        %1773 = vmatmul.mubr.bf16.gmra.mrb[0].mxu0 %v1192
        %v1774 = vpop.f32.mrb[0].mxu0
        %v1775 = vadd.f32 %v437, %v1774
        %v1776 = vpop.f32.mrb[0].mxu0
        %v1777 = vpop.f32.mrb[0].mxu0
        %v1778 = vadd.f32 %v437, %v1777
        %v1779 = vpop.f32.mrb[0].mxu0
        %1780 = vmatprep.mubr.bf16.mxu0 0
        %1781 = vmatmul.mubr.bf16.gmra.mrb[0].mxu0 %v1195
        %v1782 = vpop.f32.mrb[0].mxu0
        %v1783 = vadd.f32 %v437, %v1782
        %v1784 = vpop.f32.mrb[0].mxu0
        %v1785 = vpop.f32.mrb[0].mxu0
        %v1786 = vadd.f32 %v437, %v1785
        %v1787 = vpop.f32.mrb[0].mxu0
        %1788 = vmatprep.mubr.bf16.mxu0 0
        %1789 = vmatmul.mubr.bf16.gmra.mrb[0].mxu0 %v1198
        %v1790 = vpop.f32.mrb[0].mxu0
        %v1791 = vadd.f32 %v437, %v1790
        %v1792 = vpop.f32.mrb[0].mxu0
        %v1793 = vpop.f32.mrb[0].mxu0
        %v1794 = vadd.f32 %v437, %v1793
        %v1795 = vpop.f32.mrb[0].mxu0
        %1796 = vmatprep.mubr.bf16.mxu0 0
        %1797 = vmatmul.mubr.bf16.gmra.mrb[0].mxu0 %v1201
        %v1798 = vpop.f32.mrb[0].mxu0
        %v1799 = vadd.f32 %v437, %v1798
        %v1800 = vpop.f32.mrb[0].mxu0
        %v1801 = vpop.f32.mrb[0].mxu0
        %v1802 = vadd.f32 %v437, %v1801
        %v1803 = vpop.f32.mrb[0].mxu0
        %1804 = vmatprep.mubr.bf16.mxu0 0
        %1805 = vmatmul.mubr.bf16.gmra.mrb[0].mxu0 %v1204
        %v1806 = vpop.f32.mrb[0].mxu0
        %v1807 = vadd.f32 %v437, %v1806
        %v1808 = vpop.f32.mrb[0].mxu0
        %v1809 = vpop.f32.mrb[0].mxu0
        %v1810 = vadd.f32 %v437, %v1809
        %v1811 = vpop.f32.mrb[0].mxu0
        %1812 = vmatprep.mubr.bf16.mxu0 0
        %1813 = vmatmul.mubr.bf16.gmra.mrb[0].mxu0 %v1207
        %v1814 = vpop.f32.mrb[0].mxu0
        %v1815 = vadd.f32 %v437, %v1814
        %v1816 = vpop.f32.mrb[0].mxu0
        %v1817 = vpop.f32.mrb[0].mxu0
        %v1818 = vadd.f32 %v437, %v1817
        %v1819 = vpop.f32.mrb[0].mxu0
        %1820 = vmatprep.mubr.bf16.mxu0 0
        %1821 = vmatmul.mubr.bf16.gmra.mrb[0].mxu0 %v1210
        %v1822 = vpop.f32.mrb[0].mxu0
        %v1823 = vadd.f32 %v437, %v1822
        %v1824 = vpop.f32.mrb[0].mxu0
        %v1825 = vpop.f32.mrb[0].mxu0
        %v1826 = vadd.f32 %v437, %v1825
        %v1827 = vpop.f32.mrb[0].mxu0
        %1828 = vmatprep.mubr.bf16.mxu0 0
        %1829 = vmatmul.mubr.bf16.gmra.mrb[0].mxu0 %v1213
        %v1830 = vpop.f32.mrb[0].mxu0
        %v1831 = vadd.f32 %v437, %v1830
        %v1832 = vpop.f32.mrb[0].mxu0
        %v1833 = vpop.f32.mrb[0].mxu0
        %v1834 = vadd.f32 %v437, %v1833
        %v1835 = vpop.f32.mrb[0].mxu0
        %1836 = vmatprep.mubr.bf16.mxu0 0
        %1837 = vmatmul.mubr.bf16.gmra.mrb[0].mxu0 %v1216
        %v1838 = vpop.f32.mrb[0].mxu0
        %v1839 = vadd.f32 %v437, %v1838
        %v1840 = vpop.f32.mrb[0].mxu0
        %v1841 = vpop.f32.mrb[0].mxu0
        %v1842 = vadd.f32 %v437, %v1841
        %v1843 = vpop.f32.mrb[0].mxu0
        %1844 = vmatprep.mubr.bf16.mxu0 0
        %1845 = vmatmul.mubr.bf16.gmra.mrb[0].mxu0 %v1219
        %v1846 = vpop.f32.mrb[0].mxu0
        %v1847 = vadd.f32 %v437, %v1846
        %v1848 = vpop.f32.mrb[0].mxu0
        %v1849 = vpop.f32.mrb[0].mxu0
        %v1850 = vadd.f32 %v437, %v1849
        %v1851 = vpop.f32.mrb[0].mxu0
        %1852 = vmatprep.mubr.bf16.mxu0 0
        %1853 = vmatmul.mubr.bf16.gmra.mrb[0].mxu0 %v1222
        %v1854 = vpop.f32.mrb[0].mxu0
        %v1855 = vadd.f32 %v437, %v1854
        %v1856 = vpop.f32.mrb[0].mxu0
        %v1857 = vpop.f32.mrb[0].mxu0
        %v1858 = vadd.f32 %v437, %v1857
        %v1859 = vpop.f32.mrb[0].mxu0
        %1860 = vmatprep.mubr.bf16.mxu0 0
        %1861 = vmatmul.mubr.bf16.gmra.mrb[0].mxu0 %v1225
        %v1862 = vpop.f32.mrb[0].mxu0
        %v1863 = vadd.f32 %v437, %v1862
        %v1864 = vpop.f32.mrb[0].mxu0
        %v1865 = vpop.f32.mrb[0].mxu0
        %v1866 = vadd.f32 %v437, %v1865
        %v1867 = vpop.f32.mrb[0].mxu0
        %1868 = vmatprep.mubr.bf16.mxu0 0
        %1869 = vmatmul.mubr.bf16.gmra.mrb[0].mxu0 %v1228
        %v1870 = vpop.f32.mrb[0].mxu0
        %v1871 = vadd.f32 %v437, %v1870
        %v1872 = vpop.f32.mrb[0].mxu0
        %v1873 = vpop.f32.mrb[0].mxu0
        %v1874 = vadd.f32 %v437, %v1873
        %v1875 = vpop.f32.mrb[0].mxu0
        %1876 = vmatprep.mubr.bf16.mxu0 0
        %1877 = vmatmul.mubr.bf16.gmra.mrb[0].mxu0 %v1231
        %v1878 = vpop.f32.mrb[0].mxu0
        %v1879 = vadd.f32 %v437, %v1878
        %v1880 = vpop.f32.mrb[0].mxu0
        %v1881 = vpop.f32.mrb[0].mxu0
        %v1882 = vadd.f32 %v437, %v1881
        %v1883 = vpop.f32.mrb[0].mxu0
        %1884 = vmatprep.mubr.bf16.mxu0 0
        %1885 = vmatmul.mubr.bf16.gmra.mrb[0].mxu0 %v1234
        %v1886 = vpop.f32.mrb[0].mxu0
        %v1887 = vadd.f32 %v437, %v1886
        %v1888 = vpop.f32.mrb[0].mxu0
        %v1889 = vpop.f32.mrb[0].mxu0
        %v1890 = vadd.f32 %v437, %v1889
        %v1891 = vpop.f32.mrb[0].mxu0
        %1892 = vmatprep.mubr.bf16.mxu0 0
        %1893 = vmatmul.mubr.bf16.gmra.mrb[0].mxu0 %v1237
        %v1894 = vpop.f32.mrb[0].mxu0
        %v1895 = vadd.f32 %v437, %v1894
        %v1896 = vpop.f32.mrb[0].mxu0
        %v1897 = vpop.f32.mrb[0].mxu0
        %v1898 = vadd.f32 %v437, %v1897
        %v1899 = vpop.f32.mrb[0].mxu0
        %1900 = vmatprep.mubr.bf16.mxu0 0
        %1901 = vmatmul.mubr.bf16.gmra.mrb[0].mxu0 %v1240
        %v1902 = vpop.f32.mrb[0].mxu0
        %v1903 = vadd.f32 %v437, %v1902
        %v1904 = vpop.f32.mrb[0].mxu0
        %v1905 = vpop.f32.mrb[0].mxu0
        %v1906 = vadd.f32 %v437, %v1905
        %v1907 = vpop.f32.mrb[0].mxu0
        %1908 = vmatprep.mubr.bf16.mxu0 0
        %1909 = vmatmul.mubr.bf16.gmra.mrb[0].mxu0 %v1243
        %v1910 = vpop.f32.mrb[0].mxu0
        %v1911 = vadd.f32 %v437, %v1910
        %v1912 = vpop.f32.mrb[0].mxu0
        %v1913 = vpop.f32.mrb[0].mxu0
        %v1914 = vadd.f32 %v437, %v1913
        %v1915 = vpop.f32.mrb[0].mxu0
        %1916 = vmatprep.mubr.bf16.mxu0 0
        %1917 = vmatmul.mubr.bf16.gmra.mrb[0].mxu0 %v1246
        %v1918 = vpop.f32.mrb[0].mxu0
        %v1919 = vadd.f32 %v437, %v1918
        %v1920 = vpop.f32.mrb[0].mxu0
        %v1921 = vpop.f32.mrb[0].mxu0
        %v1922 = vadd.f32 %v437, %v1921
        %v1923 = vpop.f32.mrb[0].mxu0
        %1924 = vmatprep.mubr.bf16.mxu0 0
        %1925 = vmatmul.mubr.bf16.gmra.mrb[0].mxu0 %v1249
        %v1926 = vpop.f32.mrb[0].mxu0
        %v1927 = vadd.f32 %v437, %v1926
        %v1928 = vpop.f32.mrb[0].mxu0
        %v1929 = vpop.f32.mrb[0].mxu0
        %v1930 = vadd.f32 %v437, %v1929
        %v1931 = vpop.f32.mrb[0].mxu0
        %1932 = vmatprep.mubr.bf16.mxu0 0
        %1933 = vmatmul.mubr.bf16.gmra.mrb[0].mxu0 %v1252
        %v1934 = vpop.f32.mrb[0].mxu0
        %v1935 = vadd.f32 %v437, %v1934
        %v1936 = vpop.f32.mrb[0].mxu0
        %v1937 = vpop.f32.mrb[0].mxu0
        %v1938 = vadd.f32 %v437, %v1937
        %v1939 = vpop.f32.mrb[0].mxu0
        %1940 = vmatprep.mubr.bf16.mxu0 0
        %1941 = vmatmul.mubr.bf16.gmra.mrb[0].mxu0 %v1255
        %v1942 = vpop.f32.mrb[0].mxu0
        %v1943 = vadd.f32 %v437, %v1942
        %v1944 = vpop.f32.mrb[0].mxu0
        %v1945 = vpop.f32.mrb[0].mxu0
        %v1946 = vadd.f32 %v437, %v1945
        %v1947 = vpop.f32.mrb[0].mxu0
        %1948 = vmatprep.mubr.bf16.mxu0 0
        %1949 = vmatmul.mubr.bf16.gmra.mrb[0].mxu0 %v1258
        %v1950 = vpop.f32.mrb[0].mxu0
        %v1951 = vadd.f32 %v437, %v1950
        %v1952 = vpop.f32.mrb[0].mxu0
        %v1953 = vpop.f32.mrb[0].mxu0
        %v1954 = vadd.f32 %v437, %v1953
        %v1955 = vpop.f32.mrb[0].mxu0
        %1956 = vmatprep.mubr.bf16.mxu0 0
        %1957 = vmatmul.mubr.bf16.gmra.mrb[0].mxu0 %v1261
        %v1958 = vpop.f32.mrb[0].mxu0
        %v1959 = vadd.f32 %v437, %v1958
        %v1960 = vpop.f32.mrb[0].mxu0
        %v1961 = vpop.f32.mrb[0].mxu0
        %v1962 = vadd.f32 %v437, %v1961
        %v1963 = vpop.f32.mrb[0].mxu0
        %1964 = vmatprep.mubr.bf16.mxu0 0
        %1965 = vmatmul.mubr.bf16.gmra.mrb[0].mxu0 %v1264
        %v1966 = vpop.f32.mrb[0].mxu0
        %v1967 = vadd.f32 %v437, %v1966
        %v1968 = vpop.f32.mrb[0].mxu0
        %v1969 = vpop.f32.mrb[0].mxu0
        %v1970 = vadd.f32 %v437, %v1969
        %v1971 = vpop.f32.mrb[0].mxu0
        %1972 = vmatprep.mubr.bf16.mxu0 0
        %1973 = vmatmul.mubr.bf16.gmra.mrb[0].mxu0 %v1267
        %v1974 = vpop.f32.mrb[0].mxu0
        %v1975 = vadd.f32 %v437, %v1974
        %v1976 = vpop.f32.mrb[0].mxu0
        %v1977 = vpop.f32.mrb[0].mxu0
        %v1978 = vadd.f32 %v437, %v1977
        %v1979 = vpop.f32.mrb[0].mxu0
        %1980 = vmatprep.mubr.bf16.mxu0 0
        %1981 = vmatmul.mubr.bf16.gmra.mrb[0].mxu0 %v1270
        %v1982 = vpop.f32.mrb[0].mxu0
        %v1983 = vadd.f32 %v437, %v1982
        %v1984 = vpop.f32.mrb[0].mxu0
        %v1985 = vpop.f32.mrb[0].mxu0
        %v1986 = vadd.f32 %v437, %v1985
        %v1987 = vpop.f32.mrb[0].mxu0
        %1988 = vmatprep.mubr.bf16.mxu0 0
        %1989 = vmatmul.mubr.bf16.gmra.mrb[0].mxu0 %v1273
        %v1990 = vpop.f32.mrb[0].mxu0
        %v1991 = vadd.f32 %v437, %v1990
        %v1992 = vpop.f32.mrb[0].mxu0
        %v1993 = vpop.f32.mrb[0].mxu0
        %v1994 = vadd.f32 %v437, %v1993
        %v1995 = vpop.f32.mrb[0].mxu0
        %1996 = vmatprep.mubr.bf16.mxu0 0
        %1997 = vmatmul.mubr.bf16.gmra.mrb[0].mxu0 %v1276
        %v1998 = vpop.f32.mrb[0].mxu0
        %v1999 = vadd.f32 %v437, %v1998
        %v2000 = vpop.f32.mrb[0].mxu0
        %v2001 = vpop.f32.mrb[0].mxu0
        %v2002 = vadd.f32 %v437, %v2001
        %v2003 = vpop.f32.mrb[0].mxu0
        %2004 = vmatprep.mubr.bf16.mxu0 0
        %2005 = vmatmul.mubr.bf16.gmra.mrb[0].mxu0 %v1279
        %v2006 = vpop.f32.mrb[0].mxu0
        %v2007 = vadd.f32 %v437, %v2006
        %v2008 = vpop.f32.mrb[0].mxu0
        %v2009 = vpop.f32.mrb[0].mxu0
        %v2010 = vadd.f32 %v437, %v2009
        %v2011 = vpop.f32.mrb[0].mxu0
        %2012 = vmatprep.mubr.bf16.mxu0 0
        %2013 = vmatmul.mubr.bf16.gmra.mrb[0].mxu0 %v1282
        %v2014 = vpop.f32.mrb[0].mxu0
        %v2015 = vadd.f32 %v437, %v2014
        %v2016 = vpop.f32.mrb[0].mxu0
        %v2017 = vpop.f32.mrb[0].mxu0
        %v2018 = vadd.f32 %v437, %v2017
        %v2019 = vpop.f32.mrb[0].mxu0
        %2020 = vmatprep.mubr.bf16.mxu0 0
        %2021 = vmatmul.mubr.bf16.gmra.mrb[0].mxu0 %v1285
        %v2022 = vpop.f32.mrb[0].mxu0
        %v2023 = vadd.f32 %v437, %v2022
        %v2024 = vpop.f32.mrb[0].mxu0
        %v2025 = vpop.f32.mrb[0].mxu0
        %v2026 = vadd.f32 %v437, %v2025
        %v2027 = vpop.f32.mrb[0].mxu0
        %2028 = vmatprep.mubr.bf16.mxu0 0
        %2029 = vmatmul.mubr.bf16.gmra.mrb[0].mxu0 %v1288
        %v2030 = vpop.f32.mrb[0].mxu0
        %v2031 = vadd.f32 %v437, %v2030
        %v2032 = vpop.f32.mrb[0].mxu0
        %v2033 = vpop.f32.mrb[0].mxu0
        %v2034 = vadd.f32 %v437, %v2033
        %v2035 = vpop.f32.mrb[0].mxu0
        %2036 = vmatprep.mubr.bf16.mxu0 0
        %2037 = vmatmul.mubr.bf16.gmra.mrb[0].mxu0 %v1291
        %v2038 = vpop.f32.mrb[0].mxu0
        %v2039 = vadd.f32 %v437, %v2038
        %v2040 = vpop.f32.mrb[0].mxu0
        %v2041 = vpop.f32.mrb[0].mxu0
        %v2042 = vadd.f32 %v437, %v2041
        %v2043 = vpop.f32.mrb[0].mxu0
        %2044 = vmatprep.mubr.bf16.mxu0 0
        %2045 = vmatmul.mubr.bf16.gmra.mrb[0].mxu0 %v1294
        %v2046 = vpop.f32.mrb[0].mxu0
        %v2047 = vadd.f32 %v437, %v2046
        %v2048 = vpop.f32.mrb[0].mxu0
        %v2049 = vpop.f32.mrb[0].mxu0
        %v2050 = vadd.f32 %v437, %v2049
        %v2051 = vpop.f32.mrb[0].mxu0
        %2052 = vmatprep.mubr.bf16.mxu0 0
        %2053 = vmatmul.mubr.bf16.gmra.mrb[0].mxu0 %v1297
        %v2054 = vpop.f32.mrb[0].mxu0
        %v2055 = vadd.f32 %v437, %v2054
        %v2056 = vpop.f32.mrb[0].mxu0
        %v2057 = vpop.f32.mrb[0].mxu0
        %v2058 = vadd.f32 %v437, %v2057
        %v2059 = vpop.f32.mrb[0].mxu0
        %2060 = vmatprep.mubr.bf16.mxu0 0
        %2061 = vmatmul.mubr.bf16.gmra.mrb[0].mxu0 %v1300
        %v2062 = vpop.f32.mrb[0].mxu0
        %v2063 = vadd.f32 %v437, %v2062
        %v2064 = vpop.f32.mrb[0].mxu0
        %v2065 = vpop.f32.mrb[0].mxu0
        %v2066 = vadd.f32 %v437, %v2065
        %v2067 = vpop.f32.mrb[0].mxu0
        %2068 = vmatprep.mubr.bf16.mxu0 0
        %2069 = vmatmul.mubr.bf16.gmra.mrb[0].mxu0 %v1303
        %v2070 = vpop.f32.mrb[0].mxu0
        %v2071 = vadd.f32 %v437, %v2070
        %v2072 = vpop.f32.mrb[0].mxu0
        %v2073 = vpop.f32.mrb[0].mxu0
        %v2074 = vadd.f32 %v437, %v2073
        %v2075 = vpop.f32.mrb[0].mxu0
        %2076 = vmatprep.mubr.bf16.mxu0 0
        %2077 = vmatmul.mubr.bf16.gmra.mrb[0].mxu0 %v1306
        %v2078 = vpop.f32.mrb[0].mxu0
        %v2079 = vadd.f32 %v437, %v2078
        %v2080 = vpop.f32.mrb[0].mxu0
        %v2081 = vpop.f32.mrb[0].mxu0
        %v2082 = vadd.f32 %v437, %v2081
        %v2083 = vpop.f32.mrb[0].mxu0
        %2084 = vmatprep.mubr.bf16.mxu0 0
        %2085 = vmatmul.mubr.bf16.gmra.mrb[0].mxu0 %v1309
        %v2086 = vpop.f32.mrb[0].mxu0
        %v2087 = vadd.f32 %v437, %v2086
        %v2088 = vpop.f32.mrb[0].mxu0
        %v2089 = vpop.f32.mrb[0].mxu0
        %v2090 = vadd.f32 %v437, %v2089
        %v2091 = vpop.f32.mrb[0].mxu0
        %2092 = vmatprep.mubr.bf16.mxu0 0
        %2093 = vmatmul.mubr.bf16.gmra.mrb[0].mxu0 %v1312
        %v2094 = vpop.f32.mrb[0].mxu0
        %v2095 = vadd.f32 %v437, %v2094
        %v2096 = vpop.f32.mrb[0].mxu0
        %v2097 = vpop.f32.mrb[0].mxu0
        %v2098 = vadd.f32 %v437, %v2097
        %v2099 = vpop.f32.mrb[0].mxu0
        %2100 = vmatprep.mubr.bf16.mxu0 0
        %2101 = vmatmul.mubr.bf16.gmra.mrb[0].mxu0 %v1315
        %v2102 = vpop.f32.mrb[0].mxu0
        %v2103 = vadd.f32 %v437, %v2102
        %v2104 = vpop.f32.mrb[0].mxu0
        %v2105 = vpop.f32.mrb[0].mxu0
        %v2106 = vadd.f32 %v437, %v2105
        %v2107 = vpop.f32.mrb[0].mxu0
        %2108 = vmatprep.mubr.bf16.mxu0 0
        %2109 = vmatmul.mubr.bf16.gmra.mrb[0].mxu0 %v1318
        %v2110 = vpop.f32.mrb[0].mxu0
        %v2111 = vadd.f32 %v437, %v2110
        %v2112 = vpop.f32.mrb[0].mxu0
        %v2113 = vpop.f32.mrb[0].mxu0
        %v2114 = vadd.f32 %v437, %v2113
        %v2115 = vpop.f32.mrb[0].mxu0
        %2116 = vmatprep.mubr.bf16.mxu0 0
        %2117 = vmatmul.mubr.bf16.gmra.mrb[0].mxu0 %v1321
        %v2118 = vpop.f32.mrb[0].mxu0
        %v2119 = vadd.f32 %v437, %v2118
        %v2120 = vpop.f32.mrb[0].mxu0
        %v2121 = vpop.f32.mrb[0].mxu0
        %v2122 = vadd.f32 %v437, %v2121
        %v2123 = vpop.f32.mrb[0].mxu0
        %2124 = vmatprep.mubr.bf16.mxu0 0
        %2125 = vmatmul.mubr.bf16.gmra.mrb[0].mxu0 %v1324
        %v2126 = vpop.f32.mrb[0].mxu0
        %v2127 = vadd.f32 %v437, %v2126
        %v2128 = vpop.f32.mrb[0].mxu0
        %v2129 = vpop.f32.mrb[0].mxu0
        %v2130 = vadd.f32 %v437, %v2129
        %v2131 = vpop.f32.mrb[0].mxu0
        %2132 = vmatprep.mubr.bf16.mxu0 0
        %2133 = vmatmul.mubr.bf16.gmra.mrb[0].mxu0 %v1327
        %v2134 = vpop.f32.mrb[0].mxu0
        %v2135 = vadd.f32 %v437, %v2134
        %v2136 = vpop.f32.mrb[0].mxu0
        %v2137 = vpop.f32.mrb[0].mxu0
        %v2138 = vadd.f32 %v437, %v2137
        %v2139 = vpop.f32.mrb[0].mxu0
        %2140 = vmatprep.mubr.bf16.mxu0 0
        %2141 = vmatmul.mubr.bf16.gmra.mrb[0].mxu0 %v1330
        %v2142 = vpop.f32.mrb[0].mxu0
        %v2143 = vadd.f32 %v437, %v2142
        %v2144 = vpop.f32.mrb[0].mxu0
        %v2145 = vpop.f32.mrb[0].mxu0
        %v2146 = vadd.f32 %v437, %v2145
        %v2147 = vpop.f32.mrb[0].mxu0
        %2148 = vmatprep.mubr.bf16.mxu0 0
        %2149 = vmatmul.mubr.bf16.gmra.mrb[0].mxu0 %v1333
        %v2150 = vpop.f32.mrb[0].mxu0
        %v2151 = vadd.f32 %v437, %v2150
        %v2152 = vpop.f32.mrb[0].mxu0
        %v2153 = vpop.f32.mrb[0].mxu0
        %v2154 = vadd.f32 %v437, %v2153
        %v2155 = vpop.f32.mrb[0].mxu0
        %2156 = vmatprep.mubr.bf16.mxu0 0
        %2157 = vmatmul.mubr.bf16.gmra.mrb[0].mxu0 %v1336
        %v2158 = vpop.f32.mrb[0].mxu0
        %v2159 = vadd.f32 %v437, %v2158
        %v2160 = vpop.f32.mrb[0].mxu0
        %v2161 = vpop.f32.mrb[0].mxu0
        %v2162 = vadd.f32 %v437, %v2161
        %v2163 = vpop.f32.mrb[0].mxu0
        %2164 = vmatprep.mubr.bf16.mxu0 0
        %2165 = vmatmul.mubr.bf16.gmra.mrb[0].mxu0 %v1339
        %v2166 = vpop.f32.mrb[0].mxu0
        %v2167 = vadd.f32 %v437, %v2166
        %v2168 = vpop.f32.mrb[0].mxu0
        %v2169 = vpop.f32.mrb[0].mxu0
        %v2170 = vadd.f32 %v437, %v2169
        %v2171 = vpop.f32.mrb[0].mxu0
        %2172 = vmatprep.mubr.bf16.mxu0 0
        %2173 = vmatmul.mubr.bf16.gmra.mrb[0].mxu0 %v1342
        %v2174 = vpop.f32.mrb[0].mxu0
        %v2175 = vadd.f32 %v437, %v2174
        %v2176 = vpop.f32.mrb[0].mxu0
        %v2177 = vpop.f32.mrb[0].mxu0
        %v2178 = vadd.f32 %v437, %v2177
        %v2179 = vpop.f32.mrb[0].mxu0
        %2180 = vmatprep.mubr.bf16.mxu0 0
        %2181 = vmatmul.mubr.bf16.gmra.mrb[0].mxu0 %v1345
        %v2182 = vpop.f32.mrb[0].mxu0
        %v2183 = vadd.f32 %v437, %v2182
        %v2184 = vpop.f32.mrb[0].mxu0
        %v2185 = vpop.f32.mrb[0].mxu0
        %v2186 = vadd.f32 %v437, %v2185
        %v2187 = vpop.f32.mrb[0].mxu0
        %2188 = vmatprep.mubr.bf16.mxu0 0
        %2189 = vmatmul.mubr.bf16.gmra.mrb[0].mxu0 %v1348
        %v2190 = vpop.f32.mrb[0].mxu0
        %v2191 = vadd.f32 %v437, %v2190
        %v2192 = vpop.f32.mrb[0].mxu0
        %v2193 = vpop.f32.mrb[0].mxu0
        %v2194 = vadd.f32 %v437, %v2193
        %v2195 = vpop.f32.mrb[0].mxu0
        %2196 = vmatprep.mubr.bf16.mxu0 0
        %2197 = vmatmul.mubr.bf16.gmra.mrb[0].mxu0 %v1351
        %v2198 = vpop.f32.mrb[0].mxu0
        %v2199 = vadd.f32 %v437, %v2198
        %v2200 = vpop.f32.mrb[0].mxu0
        %v2201 = vpop.f32.mrb[0].mxu0
        %v2202 = vadd.f32 %v437, %v2201
        %v2203 = vpop.f32.mrb[0].mxu0
        %2204 = vmatprep.mubr.bf16.mxu0 0
        %2205 = vmatmul.mubr.bf16.gmra.mrb[0].mxu0 %v1354
        %v2206 = vpop.f32.mrb[0].mxu0
        %v2207 = vadd.f32 %v437, %v2206
        %v2208 = vpop.f32.mrb[0].mxu0
        %v2209 = vpop.f32.mrb[0].mxu0
        %v2210 = vadd.f32 %v437, %v2209
        %v2211 = vpop.f32.mrb[0].mxu0
        %2212 = vmatprep.mubr.bf16.mxu0 0
        %2213 = vmatmul.mubr.bf16.gmra.mrb[0].mxu0 %v1357
        %v2214 = vpop.f32.mrb[0].mxu0
        %v2215 = vadd.f32 %v437, %v2214
        %v2216 = vpop.f32.mrb[0].mxu0
        %v2217 = vpop.f32.mrb[0].mxu0
        %v2218 = vadd.f32 %v437, %v2217
        %v2219 = vpop.f32.mrb[0].mxu0
        %2220 = vmatprep.mubr.bf16.mxu0 0
        %2221 = vmatmul.mubr.bf16.gmra.mrb[0].mxu0 %v1360
        %v2222 = vpop.f32.mrb[0].mxu0
        %v2223 = vadd.f32 %v437, %v2222
        %v2224 = vpop.f32.mrb[0].mxu0
        %v2225 = vpop.f32.mrb[0].mxu0
        %v2226 = vadd.f32 %v437, %v2225
        %v2227 = vpop.f32.mrb[0].mxu0
        %2228 = vmatprep.mubr.bf16.mxu0 0
        %2229 = vmatmul.mubr.bf16.gmra.mrb[0].mxu0 %v1363
        %v2230 = vpop.f32.mrb[0].mxu0
        %v2231 = vadd.f32 %v437, %v2230
        %v2232 = vpop.f32.mrb[0].mxu0
        %v2233 = vpop.f32.mrb[0].mxu0
        %v2234 = vadd.f32 %v437, %v2233
        %v2235 = vpop.f32.mrb[0].mxu0
        %2236 = vmatprep.mubr.bf16.mxu0 0
        %2237 = vmatmul.mubr.bf16.gmra.mrb[0].mxu0 %v1366
        %v2238 = vpop.f32.mrb[0].mxu0
        %v2239 = vadd.f32 %v437, %v2238
        %v2240 = vpop.f32.mrb[0].mxu0
        %v2241 = vpop.f32.mrb[0].mxu0
        %v2242 = vadd.f32 %v437, %v2241
        %v2243 = vpop.f32.mrb[0].mxu0
        %2244 = vmatprep.mubr.bf16.mxu0 0
        %2245 = vmatmul.mubr.bf16.gmra.mrb[0].mxu0 %v1369
        %v2246 = vpop.f32.mrb[0].mxu0
        %v2247 = vadd.f32 %v437, %v2246
        %v2248 = vpop.f32.mrb[0].mxu0
        %v2249 = vpop.f32.mrb[0].mxu0
        %v2250 = vadd.f32 %v437, %v2249
        %v2251 = vpop.f32.mrb[0].mxu0
        %2252 = vmatprep.mubr.bf16.mxu0 0
        %2253 = vmatmul.mubr.bf16.gmra.mrb[0].mxu0 %v1372
        %v2254 = vpop.f32.mrb[0].mxu0
        %v2255 = vadd.f32 %v437, %v2254
        %v2256 = vpop.f32.mrb[0].mxu0
        %v2257 = vpop.f32.mrb[0].mxu0
        %v2258 = vadd.f32 %v437, %v2257
        %v2259 = vpop.f32.mrb[0].mxu0
        %2260 = vmatprep.mubr.bf16.mxu0 0
        %2261 = vmatmul.mubr.bf16.gmra.mrb[0].mxu0 %v1375
        %v2262 = vpop.f32.mrb[0].mxu0
        %v2263 = vadd.f32 %v437, %v2262
        %v2264 = vpop.f32.mrb[0].mxu0
        %v2265 = vpop.f32.mrb[0].mxu0
        %v2266 = vadd.f32 %v437, %v2265
        %v2267 = vpop.f32.mrb[0].mxu0
        %2268 = vmatprep.mubr.bf16.mxu0 0
        %2269 = vmatmul.mubr.bf16.gmra.mrb[0].mxu0 %v1378
        %v2270 = vpop.f32.mrb[0].mxu0
        %v2271 = vadd.f32 %v437, %v2270
        %v2272 = vpop.f32.mrb[0].mxu0
        %v2273 = vpop.f32.mrb[0].mxu0
        %v2274 = vadd.f32 %v437, %v2273
        %v2275 = vpop.f32.mrb[0].mxu0
        %2276 = vmatprep.mubr.bf16.mxu0 0
        %2277 = vmatmul.mubr.bf16.gmra.mrb[0].mxu0 %v1381
        %v2278 = vpop.f32.mrb[0].mxu0
        %v2279 = vadd.f32 %v437, %v2278
        %v2280 = vpop.f32.mrb[0].mxu0
        %v2281 = vpop.f32.mrb[0].mxu0
        %v2282 = vadd.f32 %v437, %v2281
        %v2283 = vpop.f32.mrb[0].mxu0
        %2284 = vmatprep.mubr.bf16.mxu0 0
        %2285 = vmatmul.mubr.bf16.gmra.mrb[0].mxu0 %v1384
        %v2286 = vpop.f32.mrb[0].mxu0
        %v2287 = vadd.f32 %v437, %v2286
        %v2288 = vpop.f32.mrb[0].mxu0
        %v2289 = vpop.f32.mrb[0].mxu0
        %v2290 = vadd.f32 %v437, %v2289
        %v2291 = vpop.f32.mrb[0].mxu0
        %2292 = vmatprep.mubr.bf16.mxu0 0
        %2293 = vmatmul.mubr.bf16.gmra.mrb[0].mxu0 %v1387
        %v2294 = vpop.f32.mrb[0].mxu0
        %v2295 = vadd.f32 %v437, %v2294
        %v2296 = vpop.f32.mrb[0].mxu0
        %v2297 = vpop.f32.mrb[0].mxu0
        %v2298 = vadd.f32 %v437, %v2297
        %v2299 = vpop.f32.mrb[0].mxu0
        %2300 = vmatprep.mubr.bf16.mxu0 0
        %2301 = vmatmul.mubr.bf16.gmra.mrb[0].mxu0 %v1390
        %v2302 = vpop.f32.mrb[0].mxu0
        %v2303 = vadd.f32 %v437, %v2302
        %v2304 = vpop.f32.mrb[0].mxu0
        %v2305 = vpop.f32.mrb[0].mxu0
        %v2306 = vadd.f32 %v437, %v2305
        %v2307 = vpop.f32.mrb[0].mxu0
        %2308 = vmatprep.mubr.bf16.mxu0 0
        %2309 = vmatmul.mubr.bf16.gmra.mrb[0].mxu0 %v1393
        %v2310 = vpop.f32.mrb[0].mxu0
        %v2311 = vadd.f32 %v437, %v2310
        %v2312 = vpop.f32.mrb[0].mxu0
        %v2313 = vpop.f32.mrb[0].mxu0
        %v2314 = vadd.f32 %v437, %v2313
        %v2315 = vpop.f32.mrb[0].mxu0
        %2316 = vmatprep.mubr.bf16.mxu0 0
        %2317 = vmatmul.mubr.bf16.gmra.mrb[0].mxu0 %v1396
        %v2318 = vpop.f32.mrb[0].mxu0
        %v2319 = vadd.f32 %v437, %v2318
        %v2320 = vpop.f32.mrb[0].mxu0
        %v2321 = vpop.f32.mrb[0].mxu0
        %v2322 = vadd.f32 %v437, %v2321
        %v2323 = vpop.f32.mrb[0].mxu0
        %2324 = vmatprep.mubr.bf16.mxu0 0
        %2325 = vmatmul.mubr.bf16.gmra.mrb[0].mxu0 %v1399
        %v2326 = vpop.f32.mrb[0].mxu0
        %v2327 = vadd.f32 %v437, %v2326
        %v2328 = vpop.f32.mrb[0].mxu0
        %v2329 = vpop.f32.mrb[0].mxu0
        %v2330 = vadd.f32 %v437, %v2329
        %v2331 = vpop.f32.mrb[0].mxu0
        %2332 = vmatprep.mubr.bf16.mxu0 0
        %2333 = vmatmul.mubr.bf16.gmra.mrb[0].mxu0 %v1402
        %v2334 = vpop.f32.mrb[0].mxu0
        %v2335 = vadd.f32 %v437, %v2334
        %v2336 = vpop.f32.mrb[0].mxu0
        %v2337 = vpop.f32.mrb[0].mxu0
        %v2338 = vadd.f32 %v437, %v2337
        %v2339 = vpop.f32.mrb[0].mxu0
        %2340 = vmatprep.mubr.bf16.mxu0 0
        %2341 = vmatmul.mubr.bf16.gmra.mrb[0].mxu0 %v1405
        %v2342 = vpop.f32.mrb[0].mxu0
        %v2343 = vadd.f32 %v437, %v2342
        %v2344 = vpop.f32.mrb[0].mxu0
        %v2345 = vpop.f32.mrb[0].mxu0
        %v2346 = vadd.f32 %v437, %v2345
        %v2347 = vpop.f32.mrb[0].mxu0
        %2348 = vmatprep.mubr.bf16.mxu0 0
        %2349 = vmatmul.mubr.bf16.gmra.mrb[0].mxu0 %v1408
        %v2350 = vpop.f32.mrb[0].mxu0
        %v2351 = vadd.f32 %v437, %v2350
        %v2352 = vpop.f32.mrb[0].mxu0
        %v2353 = vpop.f32.mrb[0].mxu0
        %v2354 = vadd.f32 %v437, %v2353
        %v2355 = vpop.f32.mrb[0].mxu0
        %2356 = vmatprep.mubr.bf16.mxu0 0
        %2357 = vmatmul.mubr.bf16.gmra.mrb[0].mxu0 %v1411
        %v2358 = vpop.f32.mrb[0].mxu0
        %v2359 = vadd.f32 %v437, %v2358
        %v2360 = vpop.f32.mrb[0].mxu0
        %v2361 = vpop.f32.mrb[0].mxu0
        %v2362 = vadd.f32 %v437, %v2361
        %v2363 = vpop.f32.mrb[0].mxu0
        %2364 = vmatprep.mubr.bf16.mxu0 0
        %2365 = vmatmul.mubr.bf16.gmra.mrb[0].mxu0 %v1414
        %v2366 = vpop.f32.mrb[0].mxu0
        %v2367 = vadd.f32 %v437, %v2366
        %v2368 = vpop.f32.mrb[0].mxu0
        %v2369 = vpop.f32.mrb[0].mxu0
        %v2370 = vadd.f32 %v437, %v2369
        %v2371 = vpop.f32.mrb[0].mxu0
        %2372 = vmatprep.mubr.bf16.mxu0 0
        %2373 = vmatmul.mubr.bf16.gmra.mrb[0].mxu0 %v1417
        %v2374 = vpop.f32.mrb[0].mxu0
        %v2375 = vadd.f32 %v437, %v2374
        %v2376 = vpop.f32.mrb[0].mxu0
        %v2377 = vpop.f32.mrb[0].mxu0
        %v2378 = vadd.f32 %v437, %v2377
        %v2379 = vpop.f32.mrb[0].mxu0
        %2380 = vmatprep.mubr.bf16.mxu0 0
        %2381 = vmatmul.mubr.bf16.gmra.mrb[0].mxu0 %v1420
        %v2382 = vpop.f32.mrb[0].mxu0
        %v2383 = vadd.f32 %v437, %v2382
        %v2384 = vpop.f32.mrb[0].mxu0
        %v2385 = vpop.f32.mrb[0].mxu0
        %v2386 = vadd.f32 %v437, %v2385
        %v2387 = vpop.f32.mrb[0].mxu0
        %2388 = vmatprep.mubr.bf16.mxu0 0
        %2389 = vmatmul.mubr.bf16.gmra.mrb[0].mxu0 %v1423
        %v2390 = vpop.f32.mrb[0].mxu0
        %v2391 = vadd.f32 %v437, %v2390
        %v2392 = vpop.f32.mrb[0].mxu0
        %v2393 = vpop.f32.mrb[0].mxu0
        %v2394 = vadd.f32 %v437, %v2393
        %v2395 = vpop.f32.mrb[0].mxu0
        %2396 = vmatprep.mubr.bf16.mxu0 0
        %2397 = vmatmul.mubr.bf16.gmra.mrb[0].mxu0 %v1426
        %v2398 = vpop.f32.mrb[0].mxu0
        %v2399 = vadd.f32 %v437, %v2398
        %v2400 = vpop.f32.mrb[0].mxu0
        %v2401 = vpop.f32.mrb[0].mxu0
        %v2402 = vadd.f32 %v437, %v2401
        %v2403 = vpop.f32.mrb[0].mxu0
        %2404 = vmatprep.mubr.bf16.mxu0 0
        %2405 = vmatmul.mubr.bf16.gmra.mrb[0].mxu0 %v1429
        %v2406 = vpop.f32.mrb[0].mxu0
        %v2407 = vadd.f32 %v437, %v2406
        %v2408 = vpop.f32.mrb[0].mxu0
        %v2409 = vpop.f32.mrb[0].mxu0
        %v2410 = vadd.f32 %v437, %v2409
        %v2411 = vpop.f32.mrb[0].mxu0
        %2412 = vmatprep.mubr.bf16.mxu0 0
        %2413 = vmatmul.mubr.bf16.gmra.mrb[0].mxu0 %v1432
        %v2414 = vpop.f32.mrb[0].mxu0
        %v2415 = vadd.f32 %v437, %v2414
        %v2416 = vpop.f32.mrb[0].mxu0
        %v2417 = vpop.f32.mrb[0].mxu0
        %v2418 = vadd.f32 %v437, %v2417
        %v2419 = vpop.f32.mrb[0].mxu0
        %2420 = vmatprep.mubr.bf16.mxu0 0
        %2421 = vmatmul.mubr.bf16.gmra.mrb[0].mxu0 %v1435
        %v2422 = vpop.f32.mrb[0].mxu0
        %v2423 = vadd.f32 %v437, %v2422
        %v2424 = vpop.f32.mrb[0].mxu0
        %v2425 = vpop.f32.mrb[0].mxu0
        %v2426 = vadd.f32 %v437, %v2425
        %v2427 = vpop.f32.mrb[0].mxu0
        %2428 = vmatprep.mubr.bf16.mxu0 0
        %2429 = vmatmul.mubr.bf16.gmra.mrb[0].mxu0 %v1438
        %v2430 = vpop.f32.mrb[0].mxu0
        %v2431 = vadd.f32 %v437, %v2430
        %v2432 = vpop.f32.mrb[0].mxu0
        %v2433 = vpop.f32.mrb[0].mxu0
        %v2434 = vadd.f32 %v437, %v2433
        %v2435 = vpop.f32.mrb[0].mxu0
        %2436 = vmatprep.mubr.bf16.mxu0 0
        %2437 = vmatmul.mubr.bf16.gmra.mrb[0].mxu0 %v1441
        %v2438 = vpop.f32.mrb[0].mxu0
        %v2439 = vadd.f32 %v437, %v2438
        %v2440 = vpop.f32.mrb[0].mxu0
        %v2441 = vpop.f32.mrb[0].mxu0
        %v2442 = vadd.f32 %v437, %v2441
        %v2443 = vpop.f32.mrb[0].mxu0
        %2444 = vmatprep.mubr.bf16.mxu0 0
        %2445 = vmatmul.mubr.bf16.gmra.mrb[0].mxu0 %v1444
        %v2446 = vpop.f32.mrb[0].mxu0
        %v2447 = vadd.f32 %v437, %v2446
        %v2448 = vpop.f32.mrb[0].mxu0
        %v2449 = vpop.f32.mrb[0].mxu0
        %v2450 = vadd.f32 %v437, %v2449
        %v2451 = vpop.f32.mrb[0].mxu0
        %2452 = vmatprep.mubr.bf16.mxu0 0
        %2453 = vmatmul.mubr.bf16.gmra.mrb[0].mxu0 %v1447
        %v2454 = vpop.f32.mrb[0].mxu0
        %v2455 = vadd.f32 %v437, %v2454
        %v2456 = vpop.f32.mrb[0].mxu0
        %v2457 = vpop.f32.mrb[0].mxu0
        %v2458 = vadd.f32 %v437, %v2457
        %v2459 = vpop.f32.mrb[0].mxu0
        %2460 = vmatprep.mubr.bf16.mxu0 0
        %2461 = vmatmul.mubr.bf16.gmra.mrb[0].mxu0 %v1450
        %v2462 = vpop.f32.mrb[0].mxu0
        %v2463 = vadd.f32 %v437, %v2462
        %v2464 = vpop.f32.mrb[0].mxu0
        %v2465 = vpop.f32.mrb[0].mxu0
        %v2466 = vadd.f32 %v437, %v2465
        %v2467 = vpop.f32.mrb[0].mxu0
        %2468 = vmatprep.mubr.bf16.mxu0 0
        %2469 = vmatmul.mubr.bf16.gmra.mrb[0].mxu0 %v1453
        %v2470 = vpop.f32.mrb[0].mxu0
        %v2471 = vadd.f32 %v437, %v2470
        %v2472 = vpop.f32.mrb[0].mxu0
        %v2473 = vpop.f32.mrb[0].mxu0
        %v2474 = vadd.f32 %v437, %v2473
        %v2475 = vpop.f32.mrb[0].mxu0
        %2476 = vmatprep.mubr.bf16.mxu0 0
        %2477 = vmatmul.mubr.bf16.gmra.mrb[0].mxu0 %v1456
        %v2478 = vpop.f32.mrb[0].mxu0
        %v2479 = vadd.f32 %v437, %v2478
        %v2480 = vpop.f32.mrb[0].mxu0
        %v2481 = vpop.f32.mrb[0].mxu0
        %v2482 = vadd.f32 %v437, %v2481
        %v2483 = vpop.f32.mrb[0].mxu0
        %2484 = vmatprep.mubr.bf16.mxu0 0
        %2485 = vmatmul.mubr.bf16.gmra.mrb[0].mxu0 %v1459
        %v2486 = vpop.f32.mrb[0].mxu0
        %v2487 = vadd.f32 %v437, %v2486
        %v2488 = vpop.f32.mrb[0].mxu0
        %v2489 = vpop.f32.mrb[0].mxu0
        %v2490 = vadd.f32 %v437, %v2489
        %v2491 = vpop.f32.mrb[0].mxu0
        %2492 = vmatprep.mubr.bf16.mxu0 0
        %2493 = vmatmul.mubr.bf16.gmra.mrb[0].mxu0 %v1462
        %v2494 = vpop.f32.mrb[0].mxu0
        %v2495 = vadd.f32 %v437, %v2494
        %v2496 = vpop.f32.mrb[0].mxu0
        %v2497 = vpop.f32.mrb[0].mxu0
        %v2498 = vadd.f32 %v437, %v2497
        %v2499 = vpop.f32.mrb[0].mxu0
        %2500 = vmatprep.mubr.bf16.mxu0 0
        %2501 = vmatmul.mubr.bf16.gmra.mrb[0].mxu0 %v1465
        %v2502 = vpop.f32.mrb[0].mxu0
        %v2503 = vadd.f32 %v437, %v2502
        %v2504 = vpop.f32.mrb[0].mxu0
        %v2505 = vpop.f32.mrb[0].mxu0
        %v2506 = vadd.f32 %v437, %v2505
        %v2507 = vpop.f32.mrb[0].mxu0
        %2508 = vmatprep.mubr.bf16.mxu0 0
        %2509 = vmatmul.mubr.bf16.gmra.mrb[0].mxu0 %v1468
        %v2510 = vpop.f32.mrb[0].mxu0
        %v2511 = vadd.f32 %v437, %v2510
        %v2512 = vpop.f32.mrb[0].mxu0
        %v2513 = vpop.f32.mrb[0].mxu0
        %v2514 = vadd.f32 %v437, %v2513
        %v2515 = vpop.f32.mrb[0].mxu0
        %2516 = vmatprep.mubr.bf16.mxu0 0
        %2517 = vmatmul.mubr.bf16.gmra.mrb[0].mxu0 %v1471
        %v2518 = vpop.f32.mrb[0].mxu0
        %v2519 = vadd.f32 %v437, %v2518
        %v2520 = vpop.f32.mrb[0].mxu0
        %v2521 = vpop.f32.mrb[0].mxu0
        %v2522 = vadd.f32 %v437, %v2521
        %v2523 = vpop.f32.mrb[0].mxu0
        %2524 = vmatprep.mubr.bf16.mxu0 0
        %2525 = vmatmul.mubr.bf16.gmra.mrb[0].mxu0 %v1474
        %v2526 = vpop.f32.mrb[0].mxu0
        %v2527 = vadd.f32 %v437, %v2526
        %v2528 = vpop.f32.mrb[0].mxu0
        %v2529 = vpop.f32.mrb[0].mxu0
        %v2530 = vadd.f32 %v437, %v2529
        %v2531 = vpop.f32.mrb[0].mxu0
        %2532 = vdwg.mxu0
        %v2533 = vmax.f32 %v1511, 0.0
        %v2534 = vmax.f32 %v1514, 0.0
        %v2535 = vmax.f32 %v1519, 0.0
        %v2536 = vmax.f32 %v1522, 0.0
        %v2537 = vmax.f32 %v1527, 0.0
        %v2538 = vmax.f32 %v1530, 0.0
        %v2539 = vmax.f32 %v1535, 0.0
        %v2540 = vmax.f32 %v1538, 0.0
        %v2541 = vmax.f32 %v1543, 0.0
        %v2542 = vmax.f32 %v1546, 0.0
        %v2543 = vmax.f32 %v1551, 0.0
        %v2544 = vmax.f32 %v1554, 0.0
        %v2545 = vmax.f32 %v1559, 0.0
        %v2546 = vmax.f32 %v1562, 0.0
        %v2547 = vmax.f32 %v1567, 0.0
        %v2548 = vmax.f32 %v1570, 0.0
        %v2549 = vmax.f32 %v1575, 0.0
        %v2550 = vmax.f32 %v1578, 0.0
        %v2551 = vmax.f32 %v1583, 0.0
        %v2552 = vmax.f32 %v1586, 0.0
        %v2553 = vmax.f32 %v1591, 0.0
        %v2554 = vmax.f32 %v1594, 0.0
        %v2555 = vmax.f32 %v1599, 0.0
        %v2556 = vmax.f32 %v1602, 0.0
        %v2557 = vmax.f32 %v1607, 0.0
        %v2558 = vmax.f32 %v1610, 0.0
        %v2559 = vmax.f32 %v1615, 0.0
        %v2560 = vmax.f32 %v1618, 0.0
        %v2561 = vmax.f32 %v1623, 0.0
        %v2562 = vmax.f32 %v1626, 0.0
        %v2563 = vmax.f32 %v1631, 0.0
        %v2564 = vmax.f32 %v1634, 0.0
        %v2565 = vmax.f32 %v1639, 0.0
        %v2566 = vmax.f32 %v1642, 0.0
        %v2567 = vmax.f32 %v1647, 0.0
        %v2568 = vmax.f32 %v1650, 0.0
        %v2569 = vmax.f32 %v1655, 0.0
        %v2570 = vmax.f32 %v1658, 0.0
        %v2571 = vmax.f32 %v1663, 0.0
        %v2572 = vmax.f32 %v1666, 0.0
        %v2573 = vmax.f32 %v1671, 0.0
        %v2574 = vmax.f32 %v1674, 0.0
        %v2575 = vmax.f32 %v1679, 0.0
        %v2576 = vmax.f32 %v1682, 0.0
        %v2577 = vmax.f32 %v1687, 0.0
        %v2578 = vmax.f32 %v1690, 0.0
        %v2579 = vmax.f32 %v1695, 0.0
        %v2580 = vmax.f32 %v1698, 0.0
        %v2581 = vmax.f32 %v1703, 0.0
        %v2582 = vmax.f32 %v1706, 0.0
        %v2583 = vmax.f32 %v1711, 0.0
        %v2584 = vmax.f32 %v1714, 0.0
        %v2585 = vmax.f32 %v1719, 0.0
        %v2586 = vmax.f32 %v1722, 0.0
        %v2587 = vmax.f32 %v1727, 0.0
        %v2588 = vmax.f32 %v1730, 0.0
        %v2589 = vmax.f32 %v1735, 0.0
        %v2590 = vmax.f32 %v1738, 0.0
        %v2591 = vmax.f32 %v1743, 0.0
        %v2592 = vmax.f32 %v1746, 0.0
        %v2593 = vmax.f32 %v1751, 0.0
        %v2594 = vmax.f32 %v1754, 0.0
        %v2595 = vmax.f32 %v1759, 0.0
        %v2596 = vmax.f32 %v1762, 0.0
        %v2597 = vmax.f32 %v1767, 0.0
        %v2598 = vmax.f32 %v1770, 0.0
        %v2599 = vmax.f32 %v1775, 0.0
        %v2600 = vmax.f32 %v1778, 0.0
        %v2601 = vmax.f32 %v1783, 0.0
        %v2602 = vmax.f32 %v1786, 0.0
        %v2603 = vmax.f32 %v1791, 0.0
        %v2604 = vmax.f32 %v1794, 0.0
        %v2605 = vmax.f32 %v1799, 0.0
        %v2606 = vmax.f32 %v1802, 0.0
        %v2607 = vmax.f32 %v1807, 0.0
        %v2608 = vmax.f32 %v1810, 0.0
        %v2609 = vmax.f32 %v1815, 0.0
        %v2610 = vmax.f32 %v1818, 0.0
        %v2611 = vmax.f32 %v1823, 0.0
        %v2612 = vmax.f32 %v1826, 0.0
        %v2613 = vmax.f32 %v1831, 0.0
        %v2614 = vmax.f32 %v1834, 0.0
        %v2615 = vmax.f32 %v1839, 0.0
        %v2616 = vmax.f32 %v1842, 0.0
        %v2617 = vmax.f32 %v1847, 0.0
        %v2618 = vmax.f32 %v1850, 0.0
        %v2619 = vmax.f32 %v1855, 0.0
        %v2620 = vmax.f32 %v1858, 0.0
        %v2621 = vmax.f32 %v1863, 0.0
        %v2622 = vmax.f32 %v1866, 0.0
        %v2623 = vmax.f32 %v1871, 0.0
        %v2624 = vmax.f32 %v1874, 0.0
        %v2625 = vmax.f32 %v1879, 0.0
        %v2626 = vmax.f32 %v1882, 0.0
        %v2627 = vmax.f32 %v1887, 0.0
        %v2628 = vmax.f32 %v1890, 0.0
        %v2629 = vmax.f32 %v1895, 0.0
        %v2630 = vmax.f32 %v1898, 0.0
        %v2631 = vmax.f32 %v1903, 0.0
        %v2632 = vmax.f32 %v1906, 0.0
        %v2633 = vmax.f32 %v1911, 0.0
        %v2634 = vmax.f32 %v1914, 0.0
        %v2635 = vmax.f32 %v1919, 0.0
        %v2636 = vmax.f32 %v1922, 0.0
        %v2637 = vmax.f32 %v1927, 0.0
        %v2638 = vmax.f32 %v1930, 0.0
        %v2639 = vmax.f32 %v1935, 0.0
        %v2640 = vmax.f32 %v1938, 0.0
        %v2641 = vmax.f32 %v1943, 0.0
        %v2642 = vmax.f32 %v1946, 0.0
        %v2643 = vmax.f32 %v1951, 0.0
        %v2644 = vmax.f32 %v1954, 0.0
        %v2645 = vmax.f32 %v1959, 0.0
        %v2646 = vmax.f32 %v1962, 0.0
        %v2647 = vmax.f32 %v1967, 0.0
        %v2648 = vmax.f32 %v1970, 0.0
        %v2649 = vmax.f32 %v1975, 0.0
        %v2650 = vmax.f32 %v1978, 0.0
        %v2651 = vmax.f32 %v1983, 0.0
        %v2652 = vmax.f32 %v1986, 0.0
        %v2653 = vmax.f32 %v1991, 0.0
        %v2654 = vmax.f32 %v1994, 0.0
        %v2655 = vmax.f32 %v1999, 0.0
        %v2656 = vmax.f32 %v2002, 0.0
        %v2657 = vmax.f32 %v2007, 0.0
        %v2658 = vmax.f32 %v2010, 0.0
        %v2659 = vmax.f32 %v2015, 0.0
        %v2660 = vmax.f32 %v2018, 0.0
        %v2661 = vmax.f32 %v2023, 0.0
        %v2662 = vmax.f32 %v2026, 0.0
        %v2663 = vmax.f32 %v2031, 0.0
        %v2664 = vmax.f32 %v2034, 0.0
        %v2665 = vmax.f32 %v2039, 0.0
        %v2666 = vmax.f32 %v2042, 0.0
        %v2667 = vmax.f32 %v2047, 0.0
        %v2668 = vmax.f32 %v2050, 0.0
        %v2669 = vmax.f32 %v2055, 0.0
        %v2670 = vmax.f32 %v2058, 0.0
        %v2671 = vmax.f32 %v2063, 0.0
        %v2672 = vmax.f32 %v2066, 0.0
        %v2673 = vmax.f32 %v2071, 0.0
        %v2674 = vmax.f32 %v2074, 0.0
        %v2675 = vmax.f32 %v2079, 0.0
        %v2676 = vmax.f32 %v2082, 0.0
        %v2677 = vmax.f32 %v2087, 0.0
        %v2678 = vmax.f32 %v2090, 0.0
        %v2679 = vmax.f32 %v2095, 0.0
        %v2680 = vmax.f32 %v2098, 0.0
        %v2681 = vmax.f32 %v2103, 0.0
        %v2682 = vmax.f32 %v2106, 0.0
        %v2683 = vmax.f32 %v2111, 0.0
        %v2684 = vmax.f32 %v2114, 0.0
        %v2685 = vmax.f32 %v2119, 0.0
        %v2686 = vmax.f32 %v2122, 0.0
        %v2687 = vmax.f32 %v2127, 0.0
        %v2688 = vmax.f32 %v2130, 0.0
        %v2689 = vmax.f32 %v2135, 0.0
        %v2690 = vmax.f32 %v2138, 0.0
        %v2691 = vmax.f32 %v2143, 0.0
        %v2692 = vmax.f32 %v2146, 0.0
        %v2693 = vmax.f32 %v2151, 0.0
        %v2694 = vmax.f32 %v2154, 0.0
        %v2695 = vmax.f32 %v2159, 0.0
        %v2696 = vmax.f32 %v2162, 0.0
        %v2697 = vmax.f32 %v2167, 0.0
        %v2698 = vmax.f32 %v2170, 0.0
        %v2699 = vmax.f32 %v2175, 0.0
        %v2700 = vmax.f32 %v2178, 0.0
        %v2701 = vmax.f32 %v2183, 0.0
        %v2702 = vmax.f32 %v2186, 0.0
        %v2703 = vmax.f32 %v2191, 0.0
        %v2704 = vmax.f32 %v2194, 0.0
        %v2705 = vmax.f32 %v2199, 0.0
        %v2706 = vmax.f32 %v2202, 0.0
        %v2707 = vmax.f32 %v2207, 0.0
        %v2708 = vmax.f32 %v2210, 0.0
        %v2709 = vmax.f32 %v2215, 0.0
        %v2710 = vmax.f32 %v2218, 0.0
        %v2711 = vmax.f32 %v2223, 0.0
        %v2712 = vmax.f32 %v2226, 0.0
        %v2713 = vmax.f32 %v2231, 0.0
        %v2714 = vmax.f32 %v2234, 0.0
        %v2715 = vmax.f32 %v2239, 0.0
        %v2716 = vmax.f32 %v2242, 0.0
        %v2717 = vmax.f32 %v2247, 0.0
        %v2718 = vmax.f32 %v2250, 0.0
        %v2719 = vmax.f32 %v2255, 0.0
        %v2720 = vmax.f32 %v2258, 0.0
        %v2721 = vmax.f32 %v2263, 0.0
        %v2722 = vmax.f32 %v2266, 0.0
        %v2723 = vmax.f32 %v2271, 0.0
        %v2724 = vmax.f32 %v2274, 0.0
        %v2725 = vmax.f32 %v2279, 0.0
        %v2726 = vmax.f32 %v2282, 0.0
        %v2727 = vmax.f32 %v2287, 0.0
        %v2728 = vmax.f32 %v2290, 0.0
        %v2729 = vmax.f32 %v2295, 0.0
        %v2730 = vmax.f32 %v2298, 0.0
        %v2731 = vmax.f32 %v2303, 0.0
        %v2732 = vmax.f32 %v2306, 0.0
        %v2733 = vmax.f32 %v2311, 0.0
        %v2734 = vmax.f32 %v2314, 0.0
        %v2735 = vmax.f32 %v2319, 0.0
        %v2736 = vmax.f32 %v2322, 0.0
        %v2737 = vmax.f32 %v2327, 0.0
        %v2738 = vmax.f32 %v2330, 0.0
        %v2739 = vmax.f32 %v2335, 0.0
        %v2740 = vmax.f32 %v2338, 0.0
        %v2741 = vmax.f32 %v2343, 0.0
        %v2742 = vmax.f32 %v2346, 0.0
        %v2743 = vmax.f32 %v2351, 0.0
        %v2744 = vmax.f32 %v2354, 0.0
        %v2745 = vmax.f32 %v2359, 0.0
        %v2746 = vmax.f32 %v2362, 0.0
        %v2747 = vmax.f32 %v2367, 0.0
        %v2748 = vmax.f32 %v2370, 0.0
        %v2749 = vmax.f32 %v2375, 0.0
        %v2750 = vmax.f32 %v2378, 0.0
        %v2751 = vmax.f32 %v2383, 0.0
        %v2752 = vmax.f32 %v2386, 0.0
        %v2753 = vmax.f32 %v2391, 0.0
        %v2754 = vmax.f32 %v2394, 0.0
        %v2755 = vmax.f32 %v2399, 0.0
        %v2756 = vmax.f32 %v2402, 0.0
        %v2757 = vmax.f32 %v2407, 0.0
        %v2758 = vmax.f32 %v2410, 0.0
        %v2759 = vmax.f32 %v2415, 0.0
        %v2760 = vmax.f32 %v2418, 0.0
        %v2761 = vmax.f32 %v2423, 0.0
        %v2762 = vmax.f32 %v2426, 0.0
        %v2763 = vmax.f32 %v2431, 0.0
        %v2764 = vmax.f32 %v2434, 0.0
        %v2765 = vmax.f32 %v2439, 0.0
        %v2766 = vmax.f32 %v2442, 0.0
        %v2767 = vmax.f32 %v2447, 0.0
        %v2768 = vmax.f32 %v2450, 0.0
        %v2769 = vmax.f32 %v2455, 0.0
        %v2770 = vmax.f32 %v2458, 0.0
        %v2771 = vmax.f32 %v2463, 0.0
        %v2772 = vmax.f32 %v2466, 0.0
        %v2773 = vmax.f32 %v2471, 0.0
        %v2774 = vmax.f32 %v2474, 0.0
        %v2775 = vmax.f32 %v2479, 0.0
        %v2776 = vmax.f32 %v2482, 0.0
        %v2777 = vmax.f32 %v2487, 0.0
        %v2778 = vmax.f32 %v2490, 0.0
        %v2779 = vmax.f32 %v2495, 0.0
        %v2780 = vmax.f32 %v2498, 0.0
        %v2781 = vmax.f32 %v2503, 0.0
        %v2782 = vmax.f32 %v2506, 0.0
        %v2783 = vmax.f32 %v2511, 0.0
        %v2784 = vmax.f32 %v2514, 0.0
        %v2785 = vmax.f32 %v2519, 0.0
        %v2786 = vmax.f32 %v2522, 0.0
        %v2787 = vmax.f32 %v2527, 0.0
        %v2788 = vmax.f32 %v2530, 0.0
        %v2789 = vadd.f32 %v2533, %v2534
        %v2790 = vadd.f32 %v2789, %v2535
        %v2791 = vadd.f32 %v2790, %v2536
        %v2792 = vadd.f32 %v2791, %v2537
        %v2793 = vadd.f32 %v2792, %v2538
        %v2794 = vadd.f32 %v2793, %v2539
        %v2795 = vadd.f32 %v2794, %v2540
        %v2796 = vadd.f32 %v2795, %v2541
        %v2797 = vadd.f32 %v2796, %v2542
        %v2798 = vadd.f32 %v2797, %v2543
        %v2799 = vadd.f32 %v2798, %v2544
        %v2800 = vadd.f32 %v2799, %v2545
        %v2801 = vadd.f32 %v2800, %v2546
        %v2802 = vadd.f32 %v2801, %v2547
        %v2803 = vadd.f32 %v2802, %v2548
        %v2804 = vadd.f32 %v2803, %v2549
        %v2805 = vadd.f32 %v2804, %v2550
        %v2806 = vadd.f32 %v2805, %v2551
        %v2807 = vadd.f32 %v2806, %v2552
        %v2808 = vadd.f32 %v2807, %v2553
        %v2809 = vadd.f32 %v2808, %v2554
        %v2810 = vadd.f32 %v2809, %v2555
        %v2811 = vadd.f32 %v2810, %v2556
        %v2812 = vadd.f32 %v2811, %v2557
        %v2813 = vadd.f32 %v2812, %v2558
        %v2814 = vadd.f32 %v2813, %v2559
        %v2815 = vadd.f32 %v2814, %v2560
        %v2816 = vadd.f32 %v2815, %v2561
        %v2817 = vadd.f32 %v2816, %v2562
        %v2818 = vadd.f32 %v2817, %v2563
        %v2819 = vadd.f32 %v2818, %v2564
        %v2820 = vrot.slane %v2819, 4
        %v2821 = vadd.f32 %v2819, %v2820
        %v2822 = vrot.slane %v2821, 2
        %v2823 = vadd.f32 %v2821, %v2822
        %v2824 = vrot.slane %v2823, 1
        %v2825 = vadd.f32 %v2823, %v2824
        %v2826 = vrcp.pop 256.0
        %v2827 = vmul.f32 %v2825, %v2826
        %v2828 = vadd.f32 %v2565, %v2566
        %v2829 = vadd.f32 %v2828, %v2567
        %v2830 = vadd.f32 %v2829, %v2568
        %v2831 = vadd.f32 %v2830, %v2569
        %v2832 = vadd.f32 %v2831, %v2570
        %v2833 = vadd.f32 %v2832, %v2571
        %v2834 = vadd.f32 %v2833, %v2572
        %v2835 = vadd.f32 %v2834, %v2573
        %v2836 = vadd.f32 %v2835, %v2574
        %v2837 = vadd.f32 %v2836, %v2575
        %v2838 = vadd.f32 %v2837, %v2576
        %v2839 = vadd.f32 %v2838, %v2577
        %v2840 = vadd.f32 %v2839, %v2578
        %v2841 = vadd.f32 %v2840, %v2579
        %v2842 = vadd.f32 %v2841, %v2580
        %v2843 = vadd.f32 %v2842, %v2581
        %v2844 = vadd.f32 %v2843, %v2582
        %v2845 = vadd.f32 %v2844, %v2583
        %v2846 = vadd.f32 %v2845, %v2584
        %v2847 = vadd.f32 %v2846, %v2585
        %v2848 = vadd.f32 %v2847, %v2586
        %v2849 = vadd.f32 %v2848, %v2587
        %v2850 = vadd.f32 %v2849, %v2588
        %v2851 = vadd.f32 %v2850, %v2589
        %v2852 = vadd.f32 %v2851, %v2590
        %v2853 = vadd.f32 %v2852, %v2591
        %v2854 = vadd.f32 %v2853, %v2592
        %v2855 = vadd.f32 %v2854, %v2593
        %v2856 = vadd.f32 %v2855, %v2594
        %v2857 = vadd.f32 %v2856, %v2595
        %v2858 = vadd.f32 %v2857, %v2596
        %v2859 = vrot.slane %v2858, 4
        %v2860 = vadd.f32 %v2858, %v2859
        %v2861 = vrot.slane %v2860, 2
        %v2862 = vadd.f32 %v2860, %v2861
        %v2863 = vrot.slane %v2862, 1
        %v2864 = vadd.f32 %v2862, %v2863
        %v2865 = vmul.f32 %v2864, %v2826
        %v2866 = vadd.f32 %v2597, %v2598
        %v2867 = vadd.f32 %v2866, %v2599
        %v2868 = vadd.f32 %v2867, %v2600
        %v2869 = vadd.f32 %v2868, %v2601
        %v2870 = vadd.f32 %v2869, %v2602
        %v2871 = vadd.f32 %v2870, %v2603
        %v2872 = vadd.f32 %v2871, %v2604
        %v2873 = vadd.f32 %v2872, %v2605
        %v2874 = vadd.f32 %v2873, %v2606
        %v2875 = vadd.f32 %v2874, %v2607
        %v2876 = vadd.f32 %v2875, %v2608
        %v2877 = vadd.f32 %v2876, %v2609
        %v2878 = vadd.f32 %v2877, %v2610
        %v2879 = vadd.f32 %v2878, %v2611
        %v2880 = vadd.f32 %v2879, %v2612
        %v2881 = vadd.f32 %v2880, %v2613
        %v2882 = vadd.f32 %v2881, %v2614
        %v2883 = vadd.f32 %v2882, %v2615
        %v2884 = vadd.f32 %v2883, %v2616
        %v2885 = vadd.f32 %v2884, %v2617
        %v2886 = vadd.f32 %v2885, %v2618
        %v2887 = vadd.f32 %v2886, %v2619
        %v2888 = vadd.f32 %v2887, %v2620
        %v2889 = vadd.f32 %v2888, %v2621
        %v2890 = vadd.f32 %v2889, %v2622
        %v2891 = vadd.f32 %v2890, %v2623
        %v2892 = vadd.f32 %v2891, %v2624
        %v2893 = vadd.f32 %v2892, %v2625
        %v2894 = vadd.f32 %v2893, %v2626
        %v2895 = vadd.f32 %v2894, %v2627
        %v2896 = vadd.f32 %v2895, %v2628
        %v2897 = vrot.slane %v2896, 4
        %v2898 = vadd.f32 %v2896, %v2897
        %v2899 = vrot.slane %v2898, 2
        %v2900 = vadd.f32 %v2898, %v2899
        %v2901 = vrot.slane %v2900, 1
        %v2902 = vadd.f32 %v2900, %v2901
        %v2903 = vmul.f32 %v2902, %v2826
        %v2904 = vadd.f32 %v2629, %v2630
        %v2905 = vadd.f32 %v2904, %v2631
        %v2906 = vadd.f32 %v2905, %v2632
        %v2907 = vadd.f32 %v2906, %v2633
        %v2908 = vadd.f32 %v2907, %v2634
        %v2909 = vadd.f32 %v2908, %v2635
        %v2910 = vadd.f32 %v2909, %v2636
        %v2911 = vadd.f32 %v2910, %v2637
        %v2912 = vadd.f32 %v2911, %v2638
        %v2913 = vadd.f32 %v2912, %v2639
        %v2914 = vadd.f32 %v2913, %v2640
        %v2915 = vadd.f32 %v2914, %v2641
        %v2916 = vadd.f32 %v2915, %v2642
        %v2917 = vadd.f32 %v2916, %v2643
        %v2918 = vadd.f32 %v2917, %v2644
        %v2919 = vadd.f32 %v2918, %v2645
        %v2920 = vadd.f32 %v2919, %v2646
        %v2921 = vadd.f32 %v2920, %v2647
        %v2922 = vadd.f32 %v2921, %v2648
        %v2923 = vadd.f32 %v2922, %v2649
        %v2924 = vadd.f32 %v2923, %v2650
        %v2925 = vadd.f32 %v2924, %v2651
        %v2926 = vadd.f32 %v2925, %v2652
        %v2927 = vadd.f32 %v2926, %v2653
        %v2928 = vadd.f32 %v2927, %v2654
        %v2929 = vadd.f32 %v2928, %v2655
        %v2930 = vadd.f32 %v2929, %v2656
        %v2931 = vadd.f32 %v2930, %v2657
        %v2932 = vadd.f32 %v2931, %v2658
        %v2933 = vadd.f32 %v2932, %v2659
        %v2934 = vadd.f32 %v2933, %v2660
        %v2935 = vrot.slane %v2934, 4
        %v2936 = vadd.f32 %v2934, %v2935
        %v2937 = vrot.slane %v2936, 2
        %v2938 = vadd.f32 %v2936, %v2937
        %v2939 = vrot.slane %v2938, 1
        %v2940 = vadd.f32 %v2938, %v2939
        %v2941 = vmul.f32 %v2940, %v2826
        %v2942 = vadd.f32 %v2661, %v2662
        %v2943 = vadd.f32 %v2942, %v2663
        %v2944 = vadd.f32 %v2943, %v2664
        %v2945 = vadd.f32 %v2944, %v2665
        %v2946 = vadd.f32 %v2945, %v2666
        %v2947 = vadd.f32 %v2946, %v2667
        %v2948 = vadd.f32 %v2947, %v2668
        %v2949 = vadd.f32 %v2948, %v2669
        %v2950 = vadd.f32 %v2949, %v2670
        %v2951 = vadd.f32 %v2950, %v2671
        %v2952 = vadd.f32 %v2951, %v2672
        %v2953 = vadd.f32 %v2952, %v2673
        %v2954 = vadd.f32 %v2953, %v2674
        %v2955 = vadd.f32 %v2954, %v2675
        %v2956 = vadd.f32 %v2955, %v2676
        %v2957 = vadd.f32 %v2956, %v2677
        %v2958 = vadd.f32 %v2957, %v2678
        %v2959 = vadd.f32 %v2958, %v2679
        %v2960 = vadd.f32 %v2959, %v2680
        %v2961 = vadd.f32 %v2960, %v2681
        %v2962 = vadd.f32 %v2961, %v2682
        %v2963 = vadd.f32 %v2962, %v2683
        %v2964 = vadd.f32 %v2963, %v2684
        %v2965 = vadd.f32 %v2964, %v2685
        %v2966 = vadd.f32 %v2965, %v2686
        %v2967 = vadd.f32 %v2966, %v2687
        %v2968 = vadd.f32 %v2967, %v2688
        %v2969 = vadd.f32 %v2968, %v2689
        %v2970 = vadd.f32 %v2969, %v2690
        %v2971 = vadd.f32 %v2970, %v2691
        %v2972 = vadd.f32 %v2971, %v2692
        %v2973 = vrot.slane %v2972, 4
        %v2974 = vadd.f32 %v2972, %v2973
        %v2975 = vrot.slane %v2974, 2
        %v2976 = vadd.f32 %v2974, %v2975
        %v2977 = vrot.slane %v2976, 1
        %v2978 = vadd.f32 %v2976, %v2977
        %v2979 = vmul.f32 %v2978, %v2826
        %v2980 = vadd.f32 %v2693, %v2694
        %v2981 = vadd.f32 %v2980, %v2695
        %v2982 = vadd.f32 %v2981, %v2696
        %v2983 = vadd.f32 %v2982, %v2697
        %v2984 = vadd.f32 %v2983, %v2698
        %v2985 = vadd.f32 %v2984, %v2699
        %v2986 = vadd.f32 %v2985, %v2700
        %v2987 = vadd.f32 %v2986, %v2701
        %v2988 = vadd.f32 %v2987, %v2702
        %v2989 = vadd.f32 %v2988, %v2703
        %v2990 = vadd.f32 %v2989, %v2704
        %v2991 = vadd.f32 %v2990, %v2705
        %v2992 = vadd.f32 %v2991, %v2706
        %v2993 = vadd.f32 %v2992, %v2707
        %v2994 = vadd.f32 %v2993, %v2708
        %v2995 = vadd.f32 %v2994, %v2709
        %v2996 = vadd.f32 %v2995, %v2710
        %v2997 = vadd.f32 %v2996, %v2711
        %v2998 = vadd.f32 %v2997, %v2712
        %v2999 = vadd.f32 %v2998, %v2713
        %v3000 = vadd.f32 %v2999, %v2714
        %v3001 = vadd.f32 %v3000, %v2715
        %v3002 = vadd.f32 %v3001, %v2716
        %v3003 = vadd.f32 %v3002, %v2717
        %v3004 = vadd.f32 %v3003, %v2718
        %v3005 = vadd.f32 %v3004, %v2719
        %v3006 = vadd.f32 %v3005, %v2720
        %v3007 = vadd.f32 %v3006, %v2721
        %v3008 = vadd.f32 %v3007, %v2722
        %v3009 = vadd.f32 %v3008, %v2723
        %v3010 = vadd.f32 %v3009, %v2724
        %v3011 = vrot.slane %v3010, 4
        %v3012 = vadd.f32 %v3010, %v3011
        %v3013 = vrot.slane %v3012, 2
        %v3014 = vadd.f32 %v3012, %v3013
        %v3015 = vrot.slane %v3014, 1
        %v3016 = vadd.f32 %v3014, %v3015
        %v3017 = vmul.f32 %v3016, %v2826
        %v3018 = vadd.f32 %v2725, %v2726
        %v3019 = vadd.f32 %v3018, %v2727
        %v3020 = vadd.f32 %v3019, %v2728
        %v3021 = vadd.f32 %v3020, %v2729
        %v3022 = vadd.f32 %v3021, %v2730
        %v3023 = vadd.f32 %v3022, %v2731
        %v3024 = vadd.f32 %v3023, %v2732
        %v3025 = vadd.f32 %v3024, %v2733
        %v3026 = vadd.f32 %v3025, %v2734
        %v3027 = vadd.f32 %v3026, %v2735
        %v3028 = vadd.f32 %v3027, %v2736
        %v3029 = vadd.f32 %v3028, %v2737
        %v3030 = vadd.f32 %v3029, %v2738
        %v3031 = vadd.f32 %v3030, %v2739
        %v3032 = vadd.f32 %v3031, %v2740
        %v3033 = vadd.f32 %v3032, %v2741
        %v3034 = vadd.f32 %v3033, %v2742
        %v3035 = vadd.f32 %v3034, %v2743
        %v3036 = vadd.f32 %v3035, %v2744
        %v3037 = vadd.f32 %v3036, %v2745
        %v3038 = vadd.f32 %v3037, %v2746
        %v3039 = vadd.f32 %v3038, %v2747
        %v3040 = vadd.f32 %v3039, %v2748
        %v3041 = vadd.f32 %v3040, %v2749
        %v3042 = vadd.f32 %v3041, %v2750
        %v3043 = vadd.f32 %v3042, %v2751
        %v3044 = vadd.f32 %v3043, %v2752
        %v3045 = vadd.f32 %v3044, %v2753
        %v3046 = vadd.f32 %v3045, %v2754
        %v3047 = vadd.f32 %v3046, %v2755
        %v3048 = vadd.f32 %v3047, %v2756
        %v3049 = vrot.slane %v3048, 4
        %v3050 = vadd.f32 %v3048, %v3049
        %v3051 = vrot.slane %v3050, 2
        %v3052 = vadd.f32 %v3050, %v3051
        %v3053 = vrot.slane %v3052, 1
        %v3054 = vadd.f32 %v3052, %v3053
        %v3055 = vmul.f32 %v3054, %v2826
        %v3056 = vadd.f32 %v2757, %v2758
        %v3057 = vadd.f32 %v3056, %v2759
        %v3058 = vadd.f32 %v3057, %v2760
        %v3059 = vadd.f32 %v3058, %v2761
        %v3060 = vadd.f32 %v3059, %v2762
        %v3061 = vadd.f32 %v3060, %v2763
        %v3062 = vadd.f32 %v3061, %v2764
        %v3063 = vadd.f32 %v3062, %v2765
        %v3064 = vadd.f32 %v3063, %v2766
        %v3065 = vadd.f32 %v3064, %v2767
        %v3066 = vadd.f32 %v3065, %v2768
        %v3067 = vadd.f32 %v3066, %v2769
        %v3068 = vadd.f32 %v3067, %v2770
        %v3069 = vadd.f32 %v3068, %v2771
        %v3070 = vadd.f32 %v3069, %v2772
        %v3071 = vadd.f32 %v3070, %v2773
        %v3072 = vadd.f32 %v3071, %v2774
        %v3073 = vadd.f32 %v3072, %v2775
        %v3074 = vadd.f32 %v3073, %v2776
        %v3075 = vadd.f32 %v3074, %v2777
        %v3076 = vadd.f32 %v3075, %v2778
        %v3077 = vadd.f32 %v3076, %v2779
        %v3078 = vadd.f32 %v3077, %v2780
        %v3079 = vadd.f32 %v3078, %v2781
        %v3080 = vadd.f32 %v3079, %v2782
        %v3081 = vadd.f32 %v3080, %v2783
        %v3082 = vadd.f32 %v3081, %v2784
        %v3083 = vadd.f32 %v3082, %v2785
        %v3084 = vadd.f32 %v3083, %v2786
        %v3085 = vadd.f32 %v3084, %v2787
        %v3086 = vadd.f32 %v3085, %v2788
        %v3087 = vrot.slane %v3086, 4
        %v3088 = vadd.f32 %v3086, %v3087
        %v3089 = vrot.slane %v3088, 2
        %v3090 = vadd.f32 %v3088, %v3089
        %v3091 = vrot.slane %v3090, 1
        %v3092 = vadd.f32 %v3090, %v3091
        %v3093 = vmul.f32 %v3092, %v2826
        %vm3094 = vcmask 1040384
        %v3095 = vsel %vm3094, %v2827, %v2865
        %vm3096 = vcmask 1041408
        %v3097 = vsel %vm3096, %v3095, %v2903
        %vm3098 = vcmask 1042432
        %v3099 = vsel %vm3098, %v3097, %v2941
        %vm3100 = vcmask 1043456
        %v3101 = vsel %vm3100, %v3099, %v2979
        %vm3102 = vcmask 1044480
        %v3103 = vsel %vm3102, %v3101, %v3017
        %vm3104 = vcmask 1045504
        %v3105 = vsel %vm3104, %v3103, %v3055
        %vm3106 = vcmask 1046528
        %v3107 = vsel %vm3106, %v3105, %v3093
        %3108 = vst [vmem:[%s164] sm:$0xff] %v3107
        %s3109 = sand.u32 %s93, 1
        %s3110 = scalar_lea.sflag [#allocation3], %s3109
        %s3111 = sand.u32 %s93, 1
        %s3112 = smul.addr %s3111, 8
        %s3113 = scalar_lea.vmem [#allocation2], %s3112
        // Predicated region
        $region33: #{tpu_custom_call.1} parent=31 // pred_check
          %p3114 = pneg %p103
        $region34: #{tpu_custom_call.1} parent=31 // pred_check_branch
          %3116 = sbr.rel (%p3114) target = $region36
        $region35: #{tpu_custom_call.1} parent=31 // pred_region
          %s3118 = ssub.s32 128, 128
          %3119 = vsyncadd %s3110, %s3118
          %s3120 = smul.addr %s17, 128
          %s3121 = scalar_lea.hbm %s3, %s3120
          %s3123 = sshll.u32 %s3113, 4
          %s3124 = int_to_ptr.vmem [resolvable:$true] %s3123
          %3126 = dma.vmem_to_hbm [thread:$0]  %s3124, 128, %s3121, %s3110
        $region36: #{tpu_custom_call.1} parent=31 // pred_fallthru
          _
      $region32: #{tpu_custom_call.1} parent=5 // pred_fallthru
        _
      %p3127 = scmp.le.s32.totalorder 2, %s12
      // Predicated region
      $region37: #{tpu_custom_call.1} parent=5 // pred_check
        %p3128 = pneg %p3127
      $region38: #{tpu_custom_call.1} parent=5 // pred_check_branch
        %3130 = sbr.rel (%p3128) target = $region40
      $region39: #{tpu_custom_call.1} parent=5 // pred_region
        %s3131 = ssub.s32 %s12, 2
        // Predicated region
        $region41: #{tpu_custom_call.1} parent=39 // pred_check
          %p3132 = pneg %p109
        $region42: #{tpu_custom_call.1} parent=39 // pred_check_branch
          %3134 = sbr.rel (%p3132) target = $region44
        $region43: #{tpu_custom_call.1} parent=39 // pred_region
          %s3135 = sand.u32 %s94, 1
          %s3136 = scalar_lea.sflag [#allocation3], %s3135
          %s3137 = sand.u32 %s94, 1
          %s3138 = smul.addr %s3137, 8
          %s3139 = scalar_lea.vmem [#allocation2], %s3138
          %3140 = dma.done %s3136, 128
        $region44: #{tpu_custom_call.1} parent=39 // pred_fallthru
          _
      $region40: #{tpu_custom_call.1} parent=5 // pred_fallthru
        _
    $region6: #{tpu_custom_call.1} parent=1 // loop_footer
      %s16 = sadd.s32 1, %s12
    $region7: #{tpu_custom_call.1} parent=1 // loop_footer_branch
      %11 = sbr.rel target = $region3
    $region8: #{tpu_custom_call.1} parent=1 // loop_exit
      _
    %3141 = vsyncpa [#allocation3], 1
    %s3142 = scalar_lea.sflag [#allocation3], 1
    %3143 = vsyncpa %s3142, 1

</llo_original>
